<compile_context>
chip_gen: v6e
topology: v6e:2x2x1
jax: 0.10.0
libtpu: 0.0.40
codegen_flags: <defaults>
</compile_context>

<pallas_src>
import functools
import math

import jax
import jax.numpy as jnp
from jax.experimental import pallas as pl
from jax.experimental.pallas import tpu as pltpu

HIDDEN = 512
OUT_PAD = 128  # final layer padded from 1 -> 128 lanes (lane-dense stores)


def _ceil_to(x, m):
    return ((x + m - 1) // m) * m


def _leaky_relu(x, slope=0.2):
    # Valid for 0 < slope < 1: max(x, slope*x) == leaky_relu(x).
    return jnp.maximum(x, slope * x)


def _disc_mlp_kernel(xi_ref, ep_ref, w1_ref, w2_ref, b2_ref,
                     w3_ref, b3_ref, w4_ref, b4_ref, o_ref):
    """Whole MLP hot path: 4 bf16-in / f32-acc matmuls + LeakyReLU in VMEM."""
    # Layer 1: image matmul only; the label-embedding contribution and b1 are
    # folded into ep_ref (gathered per-row in the wrapper).
    h = (jnp.dot(xi_ref[...].astype(jnp.bfloat16), w1_ref[...],
                 preferred_element_type=jnp.float32)
         + ep_ref[...])
    h = _leaky_relu(h)

    # Layer 2 (Dropout(0.4) -> identity in eval mode)
    h = jnp.dot(h.astype(jnp.bfloat16), w2_ref[...],
                preferred_element_type=jnp.float32) + b2_ref[...]
    h = _leaky_relu(h)

    # Layer 3 (Dropout(0.4) -> identity in eval mode)
    h = jnp.dot(h.astype(jnp.bfloat16), w3_ref[...],
                preferred_element_type=jnp.float32) + b3_ref[...]
    h = _leaky_relu(h)

    # Layer 4: W4 padded to (HIDDEN, OUT_PAD); only column 0 is meaningful.
    o_ref[...] = jnp.dot(h.astype(jnp.bfloat16), w4_ref[...],
                         preferred_element_type=jnp.float32) + b4_ref[...]


def init_discriminator_params(key, numclasses, img_shape):
    """Deterministic params matching the PyTorch module, pre-folded / bf16."""
    d_img = int(math.prod(img_shape))
    keys = jax.random.split(key, 9)

    def linear(kw, kb, fan_in, fan_out):
        bound = 1.0 / math.sqrt(fan_in)
        w = jax.random.uniform(kw, (fan_in, fan_out), jnp.float32, -bound, bound)
        b = jax.random.uniform(kb, (1, fan_out), jnp.float32, -bound, bound)
        return w, b

    emb = jax.random.normal(keys[0], (numclasses, numclasses), jnp.float32)

    # Layer 1 weight split by the cat([img, emb]) order; the embedding path is
    # folded into a per-class bias table: emb_proj[c] = emb[c] @ W1_emb + b1.
    w1, b1 = linear(keys[1], keys[2], d_img + numclasses, HIDDEN)
    w1_img = w1[:d_img].astype(jnp.bfloat16)              # (d_img, HIDDEN)
    emb_proj = (emb @ w1[d_img:] + b1).astype(jnp.float32)  # (numclasses, HIDDEN)

    w2, b2 = linear(keys[3], keys[4], HIDDEN, HIDDEN)
    w3, b3 = linear(keys[5], keys[6], HIDDEN, HIDDEN)
    w4, b4 = linear(keys[7], keys[8], HIDDEN, 1)
    w4 = jnp.pad(w4, ((0, 0), (0, OUT_PAD - 1)))
    b4 = jnp.pad(b4, ((0, 0), (0, OUT_PAD - 1)))

    return dict(emb_proj=emb_proj, w1_img=w1_img,
                w2=w2.astype(jnp.bfloat16), b2=b2,
                w3=w3.astype(jnp.bfloat16), b3=b3,
                w4=w4.astype(jnp.bfloat16), b4=b4)


def _num_tensorcores():
    """2 for dual-TensorCore chips (v7x); 1 otherwise (v5e/v6e)."""
    try:
        kind = jax.devices()[0].device_kind.lower()
    except Exception:
        return 1
    return 2 if ("v7" in kind or "7x" in kind) else 1


def _const_spec(shape):
    """Constant-index (weight/bias) block: single-buffered, no re-fetch."""
    idx = lambda i: (0,) * len(shape)
    try:
        return pl.BlockSpec(shape, idx, pipeline_mode=pl.Buffered(1))
    except TypeError:  # older JAX without pipeline_mode kwarg
        return pl.BlockSpec(shape, idx)


@functools.partial(jax.jit, static_argnames=("tile_b",))
def discriminator_forward(img, labels, params, *, tile_b=256):
    B = img.shape[0]
    flat = img.reshape(B, -1).astype(jnp.float32)
    d_img = flat.shape[1]
    hidden = params["w2"].shape[0]
    out_pad = params["w4"].shape[1]

    # ---- batch-tile policy (generation-aware, all static Python) ----------
    num_tc = _num_tensorcores()
    b8 = max(8, _ceil_to(B, 8))
    tb = max(8, (min(tile_b, b8) // 8) * 8)          # always a multiple of 8
    if num_tc >= 2 and b8 >= 16:
        # Dual-TC chips: force >= 2 grid steps so ("parallel",) shards across
        # both TensorCores. Single-TC chips keep one big tile (grid = loop).
        tb = min(tb, max(8, ((b8 // 2) // 8) * 8))
    B_pad = _ceil_to(B, tb)

    # ---- inputs: f32 flat image (cast in-kernel) + gathered per-row bias ---
    xi = jnp.pad(flat, ((0, B_pad - B), (0, 0)))                    # (B_pad, d_img) f32
    ep = jnp.take(params["emb_proj"], labels, axis=0)               # (B, HIDDEN) f32
    ep = jnp.pad(ep, ((0, B_pad - B), (0, 0)))                      # (B_pad, HIDDEN)

    # ---- VMEM budget estimate -> raise scoped limit only if needed --------
    vmem_est = (2 * tb * (d_img + hidden + out_pad) * 4             # dbl-buffered I/O
                + (d_img + 2 * hidden) * hidden * 2 + hidden * out_pad * 2  # weights
                + 4 * tb * hidden * 4 + 3 * hidden * 4)             # activations/biases
    ckwargs = dict(dimension_semantics=("parallel",))
    if vmem_est > 12 * 1024 * 1024:
        ckwargs["vmem_limit_bytes"] = min(int(vmem_est * 3 // 2), 64 * 1024 * 1024)

    grid = (B_pad // tb,)
    out = pl.pallas_call(
        _disc_mlp_kernel,
        out_shape=jax.ShapeDtypeStruct((B_pad, out_pad), jnp.float32),
        grid=grid,
        in_specs=[
            pl.BlockSpec((tb, d_img), lambda i: (i, 0)),    # flat image (f32)
            pl.BlockSpec((tb, hidden), lambda i: (i, 0)),   # emb_proj rows (emb@W1_emb + b1)
            _const_spec((d_img, hidden)),                   # W1_img (bf16)
            _const_spec((hidden, hidden)),                  # W2
            _const_spec((1, hidden)),                       # b2
            _const_spec((hidden, hidden)),                  # W3
            _const_spec((1, hidden)),                       # b3
            _const_spec((hidden, out_pad)),                 # W4 (padded to 128 lanes)
            _const_spec((1, out_pad)),                      # b4 (padded)
        ],
        out_specs=pl.BlockSpec((tb, out_pad), lambda i: (i, 0)),
        compiler_params=pltpu.CompilerParams(**ckwargs),
    )(xi, ep, params["w1_img"], params["w2"], params["b2"],
      params["w3"], params["b3"], params["w4"], params["b4"])

    return out[:B, :1]


def _reference_forward(img, labels, params):
    """Pure-JAX reference mirroring the kernel's math (eval-mode forward)."""
    B = img.shape[0]
    flat = img.reshape(B, -1).astype(jnp.float32)
    ep = jnp.take(params["emb_proj"], labels, axis=0)

    h = (jnp.dot(flat.astype(jnp.bfloat16), params["w1_img"],
                 preferred_element_type=jnp.float32) + ep)
    h = _leaky_relu(h)
    h = jnp.dot(h.astype(jnp.bfloat16), params["w2"],
                preferred_element_type=jnp.float32) + params["b2"]
    h = _leaky_relu(h)
    h = jnp.dot(h.astype(jnp.bfloat16), params["w3"],
                preferred_element_type=jnp.float32) + params["b3"]
    h = _leaky_relu(h)
    out = jnp.dot(h.astype(jnp.bfloat16), params["w4"],
                  preferred_element_type=jnp.float32) + params["b4"]
    return out[:, :1]


if __name__ == "__main__":
    numclasses = 10
    img_shape = (1, 16, 16)          # (C, H, W) -> prod = 256
    batch = 4

    key = jax.random.PRNGKey(0)
    k_params, k_img, k_lbl = jax.random.split(key, 3)

    params = init_discriminator_params(k_params, numclasses, img_shape)
    img = jax.random.normal(k_img, (batch,) + img_shape, jnp.float32)   # NCHW
    labels = jax.random.randint(k_lbl, (batch,), 0, numclasses, jnp.int32)

    validity = discriminator_forward(img, labels, params)
    jax.block_until_ready(validity)

    ref = _reference_forward(img, labels, params)
    assert validity.shape == (batch, 1)
    assert jnp.allclose(validity, ref, atol=1e-2, rtol=1e-2), (
        jnp.max(jnp.abs(validity - ref)))

    print("KERNEL_OK")
</pallas_src>

<mosaic_0001>
module attributes {stable_mosaic.version = 11 : i64} {
  func.func @_disc_mlp_kernel(%arg0: i32, %arg1: memref<8x256xf32, #tpu.memory_space<vmem>>, %arg2: memref<8x512xf32, #tpu.memory_space<vmem>>, %arg3: memref<256x512xbf16, #tpu.memory_space<vmem>>, %arg4: memref<512x512xbf16, #tpu.memory_space<vmem>>, %arg5: memref<1x512xf32, #tpu.memory_space<vmem>>, %arg6: memref<512x512xbf16, #tpu.memory_space<vmem>>, %arg7: memref<1x512xf32, #tpu.memory_space<vmem>>, %arg8: memref<512x128xbf16, #tpu.memory_space<vmem>>, %arg9: memref<1x128xf32, #tpu.memory_space<vmem>>, %arg10: memref<8x128xf32, #tpu.memory_space<vmem>>) attributes {dimension_semantics = [#tpu.dimension_semantics<parallel>], iteration_bounds = array<i64: 1>, scalar_prefetch = 0 : i64, scratch_operands = 0 : i64, tpu.core_type = #tpu.core_type<tc>, window_params = [{transform_indices = @transform_0, window_bounds = array<i64: 8, 256>}, {transform_indices = @transform_1, window_bounds = array<i64: 8, 512>}, {pipeline_mode = #tpu.pipeline_mode<synchronous>, transform_indices = @transform_2, window_bounds = array<i64: 256, 512>}, {pipeline_mode = #tpu.pipeline_mode<synchronous>, transform_indices = @transform_3, window_bounds = array<i64: 512, 512>}, {pipeline_mode = #tpu.pipeline_mode<synchronous>, transform_indices = @transform_4, window_bounds = array<i64: 1, 512>}, {pipeline_mode = #tpu.pipeline_mode<synchronous>, transform_indices = @transform_5, window_bounds = array<i64: 512, 512>}, {pipeline_mode = #tpu.pipeline_mode<synchronous>, transform_indices = @transform_6, window_bounds = array<i64: 1, 512>}, {pipeline_mode = #tpu.pipeline_mode<synchronous>, transform_indices = @transform_7, window_bounds = array<i64: 512, 128>}, {pipeline_mode = #tpu.pipeline_mode<synchronous>, transform_indices = @transform_8, window_bounds = array<i64: 1, 128>}, {transform_indices = @transform_9, window_bounds = array<i64: 8, 128>}]} {
    %c0 = arith.constant 0 : index
    %c0_0 = arith.constant 0 : index
    %0 = vector.load %arg1[%c0, %c0_0] : memref<8x256xf32, #tpu.memory_space<vmem>>, vector<8x256xf32>
    %1 = arith.truncf %0 : vector<8x256xf32> to vector<8x256xbf16>
    %c0_1 = arith.constant 0 : index
    %c0_2 = arith.constant 0 : index
    %2 = vector.load %arg3[%c0_1, %c0_2] : memref<256x512xbf16, #tpu.memory_space<vmem>>, vector<256x512xbf16>
    %cst = arith.constant dense<0.000000e+00> : vector<8x512xf32>
    %3 = tpu.matmul %1, %2, %cst {dimension_numbers = #tpu.dot_dimension_numbers<[1], [0], [0], [1], [0, 0, 1, 1], [], []>} : vector<8x256xbf16>, vector<256x512xbf16>, vector<8x512xf32> -> vector<8x512xf32>
    %c0_3 = arith.constant 0 : index
    %c0_4 = arith.constant 0 : index
    %4 = vector.load %arg2[%c0_3, %c0_4] : memref<8x512xf32, #tpu.memory_space<vmem>>, vector<8x512xf32>
    %5 = arith.addf %3, %4 : vector<8x512xf32>
    %cst_5 = arith.constant 2.000000e-01 : f32
    %6 = vector.broadcast %cst_5 : f32 to vector<8x512xf32>
    %7 = arith.mulf %6, %5 : vector<8x512xf32>
    %8 = arith.maximumf %5, %7 : vector<8x512xf32>
    %9 = arith.truncf %8 : vector<8x512xf32> to vector<8x512xbf16>
    %c0_6 = arith.constant 0 : index
    %c0_7 = arith.constant 0 : index
    %10 = vector.load %arg4[%c0_6, %c0_7] : memref<512x512xbf16, #tpu.memory_space<vmem>>, vector<512x512xbf16>
    %cst_8 = arith.constant dense<0.000000e+00> : vector<8x512xf32>
    %11 = tpu.matmul %9, %10, %cst_8 {dimension_numbers = #tpu.dot_dimension_numbers<[1], [0], [0], [1], [0, 0, 1, 1], [], []>} : vector<8x512xbf16>, vector<512x512xbf16>, vector<8x512xf32> -> vector<8x512xf32>
    %c0_9 = arith.constant 0 : index
    %c0_10 = arith.constant 0 : index
    %12 = vector.load %arg5[%c0_9, %c0_10] : memref<1x512xf32, #tpu.memory_space<vmem>>, vector<1x512xf32>
    %13 = vector.broadcast %12 : vector<1x512xf32> to vector<8x512xf32>
    %14 = arith.addf %11, %13 : vector<8x512xf32>
    %cst_11 = arith.constant 2.000000e-01 : f32
    %15 = vector.broadcast %cst_11 : f32 to vector<8x512xf32>
    %16 = arith.mulf %15, %14 : vector<8x512xf32>
    %17 = arith.maximumf %14, %16 : vector<8x512xf32>
    %18 = arith.truncf %17 : vector<8x512xf32> to vector<8x512xbf16>
    %c0_12 = arith.constant 0 : index
    %c0_13 = arith.constant 0 : index
    %19 = vector.load %arg6[%c0_12, %c0_13] : memref<512x512xbf16, #tpu.memory_space<vmem>>, vector<512x512xbf16>
    %cst_14 = arith.constant dense<0.000000e+00> : vector<8x512xf32>
    %20 = tpu.matmul %18, %19, %cst_14 {dimension_numbers = #tpu.dot_dimension_numbers<[1], [0], [0], [1], [0, 0, 1, 1], [], []>} : vector<8x512xbf16>, vector<512x512xbf16>, vector<8x512xf32> -> vector<8x512xf32>
    %c0_15 = arith.constant 0 : index
    %c0_16 = arith.constant 0 : index
    %21 = vector.load %arg7[%c0_15, %c0_16] : memref<1x512xf32, #tpu.memory_space<vmem>>, vector<1x512xf32>
    %22 = vector.broadcast %21 : vector<1x512xf32> to vector<8x512xf32>
    %23 = arith.addf %20, %22 : vector<8x512xf32>
    %cst_17 = arith.constant 2.000000e-01 : f32
    %24 = vector.broadcast %cst_17 : f32 to vector<8x512xf32>
    %25 = arith.mulf %24, %23 : vector<8x512xf32>
    %26 = arith.maximumf %23, %25 : vector<8x512xf32>
    %27 = arith.truncf %26 : vector<8x512xf32> to vector<8x512xbf16>
    %c0_18 = arith.constant 0 : index
    %c0_19 = arith.constant 0 : index
    %28 = vector.load %arg8[%c0_18, %c0_19] : memref<512x128xbf16, #tpu.memory_space<vmem>>, vector<512x128xbf16>
    %cst_20 = arith.constant dense<0.000000e+00> : vector<8x128xf32>
    %29 = tpu.matmul %27, %28, %cst_20 {dimension_numbers = #tpu.dot_dimension_numbers<[1], [0], [0], [1], [0, 0, 1, 1], [], []>} : vector<8x512xbf16>, vector<512x128xbf16>, vector<8x128xf32> -> vector<8x128xf32>
    %c0_21 = arith.constant 0 : index
    %c0_22 = arith.constant 0 : index
    %30 = vector.load %arg9[%c0_21, %c0_22] : memref<1x128xf32, #tpu.memory_space<vmem>>, vector<1x128xf32>
    %31 = vector.broadcast %30 : vector<1x128xf32> to vector<8x128xf32>
    %32 = arith.addf %29, %31 : vector<8x128xf32>
    %c0_23 = arith.constant 0 : index
    %c0_24 = arith.constant 0 : index
    %33 = vector.load %arg10[%c0_23, %c0_24] : memref<8x128xf32, #tpu.memory_space<vmem>>, vector<8x128xf32>
    tpu.vector_store %arg10[%c0_23, %c0_24], %32 {strides = array<i32>} : memref<8x128xf32, #tpu.memory_space<vmem>>, vector<8x128xf32>,
    return
  }
  func.func @transform_0(%arg0: i32) -> (i32, i32) {
    %c0_i32 = arith.constant 0 : i32
    %c0_i32_0 = arith.constant 0 : i32
    return %arg0, %c0_i32 : i32, i32
  }
  func.func @transform_1(%arg0: i32) -> (i32, i32) {
    %c0_i32 = arith.constant 0 : i32
    %c0_i32_0 = arith.constant 0 : i32
    return %arg0, %c0_i32 : i32, i32
  }
  func.func @transform_2(%arg0: i32) -> (i32, i32) {
    %c0_i32 = arith.constant 0 : i32
    %c0_i32_0 = arith.constant 0 : i32
    %c0_i32_1 = arith.constant 0 : i32
    return %c0_i32, %c0_i32_0 : i32, i32
  }
  func.func @transform_3(%arg0: i32) -> (i32, i32) {
    %c0_i32 = arith.constant 0 : i32
    %c0_i32_0 = arith.constant 0 : i32
    %c0_i32_1 = arith.constant 0 : i32
    return %c0_i32, %c0_i32_0 : i32, i32
  }
  func.func @transform_4(%arg0: i32) -> (i32, i32) {
    %c0_i32 = arith.constant 0 : i32
    %c0_i32_0 = arith.constant 0 : i32
    %c0_i32_1 = arith.constant 0 : i32
    return %c0_i32, %c0_i32_0 : i32, i32
  }
  func.func @transform_5(%arg0: i32) -> (i32, i32) {
    %c0_i32 = arith.constant 0 : i32
    %c0_i32_0 = arith.constant 0 : i32
    %c0_i32_1 = arith.constant 0 : i32
    return %c0_i32, %c0_i32_0 : i32, i32
  }
  func.func @transform_6(%arg0: i32) -> (i32, i32) {
    %c0_i32 = arith.constant 0 : i32
    %c0_i32_0 = arith.constant 0 : i32
    %c0_i32_1 = arith.constant 0 : i32
    return %c0_i32, %c0_i32_0 : i32, i32
  }
  func.func @transform_7(%arg0: i32) -> (i32, i32) {
    %c0_i32 = arith.constant 0 : i32
    %c0_i32_0 = arith.constant 0 : i32
    %c0_i32_1 = arith.constant 0 : i32
    return %c0_i32, %c0_i32_0 : i32, i32
  }
  func.func @transform_8(%arg0: i32) -> (i32, i32) {
    %c0_i32 = arith.constant 0 : i32
    %c0_i32_0 = arith.constant 0 : i32
    %c0_i32_1 = arith.constant 0 : i32
    return %c0_i32, %c0_i32_0 : i32, i32
  }
  func.func @transform_9(%arg0: i32) -> (i32, i32) {
    %c0_i32 = arith.constant 0 : i32
    %c0_i32_0 = arith.constant 0 : i32
    return %arg0, %c0_i32 : i32, i32
  }
}

</mosaic_0001>

<llo_original>
// kernel: discriminator_forward.1
$region0: #{discriminator_forward.1}
  #allocation0 [shape = 'u32[]', space=smem, size = 0x4, offset = 0x4, fixed_abs, tag = 'smem constant byte address 0x4 - core index']
  #allocation1 [shape = 'u32[144,128]{1,0:T(1,128)}', space=vmem, size = 0x12000, scoped, tag = 'internal scratch']
  %s0 = inlined_call_operand.vmem [shape: f32[8,256], index: 0, kind: input, shape index: {}]
  %s1 = inlined_call_operand.vmem [shape: f32[8,512], index: 1, kind: input, shape index: {}]
  %s2 = inlined_call_operand.hbm [shape: bf16[256,512], index: 2, kind: input, shape index: {}]
  %s3 = inlined_call_operand.hbm [shape: bf16[512,512], index: 3, kind: input, shape index: {}]
  %s4 = inlined_call_operand.vmem [shape: f32[1,512], index: 4, kind: input, shape index: {}]
  %s5 = inlined_call_operand.hbm [shape: bf16[512,512], index: 5, kind: input, shape index: {}]
  %s6 = inlined_call_operand.vmem [shape: f32[1,512], index: 6, kind: input, shape index: {}]
  %s7 = inlined_call_operand.vmem [shape: bf16[512,128], index: 7, kind: input, shape index: {}]
  %s8 = inlined_call_operand.vmem [shape: f32[1,128], index: 8, kind: input, shape index: {}]
  %s9 = inlined_call_operand.vmem [shape: f32[8,128], index: 9, kind: output, shape index: {}]
  %s10 = sld [smem:[#allocation0]]
  $region58: #{discriminator_forward.1} parent=0
    _
  %s12 = ssub.s32 1, %s10
  %s13 = scalar_select 0, %s12, %s10
  $region1: #{discriminator_forward.1} parent=0
    #allocation2 [shape = 'u8[262144]{0}', space=vmem, size = 0x40000, scoped, tag = 'input window, operand 2, single buffered']
    #allocation3 [shape = 's32[1]{0}', space=sflag, size = 0x4, scoped, tag = 'scoped memory for discriminator_forward.1']
    #allocation4 [shape = 'u8[524288]{0}', space=vmem, size = 0x80000, scoped, tag = 'input window, operand 3, single buffered']
    #allocation5 [shape = 's32[1]{0}', space=sflag, size = 0x4, scoped, tag = 'scoped memory for discriminator_forward.1']
    #allocation6 [shape = 'u8[524288]{0}', space=vmem, size = 0x80000, scoped, tag = 'input window, operand 5, single buffered']
    %14 = vsyncpa [#allocation3], 0
    %15 = vsyncpa [#allocation5], 0
    // Predicated region
    $region2: #{discriminator_forward.1} parent=1 // pred_check
      _
    $region3: #{discriminator_forward.1} parent=1 // pred_check_branch
      %17 = sbr.rel (0) target = $region5
    $region4: #{discriminator_forward.1} parent=1 // pred_region
      _
    $region5: #{discriminator_forward.1} parent=1 // pred_fallthru
      _
    // Predicated region
    $region6: #{discriminator_forward.1} parent=1 // pred_check
      _
    $region7: #{discriminator_forward.1} parent=1 // pred_check_branch
      %19 = sbr.rel (0) target = $region9
    $region8: #{discriminator_forward.1} parent=1 // pred_region
      _
    $region9: #{discriminator_forward.1} parent=1 // pred_fallthru
      _
    // Predicated region
    $region10: #{discriminator_forward.1} parent=1 // pred_check
      _
    $region11: #{discriminator_forward.1} parent=1 // pred_check_branch
      %21 = sbr.rel (0) target = $region13
    $region12: #{discriminator_forward.1} parent=1 // pred_region
      %s23 = ssub.s32 8192, 8192
      %24 = vsyncadd [#allocation3], %s23
      %s25 = sshll.u32 [#allocation2], 4
      %s26 = int_to_ptr.vmem [resolvable:$true] %s25
      %31 = dma.hbm_to_vmem [thread:$0]  %s2, 8192, %s26, [#allocation3], 256, 256, 16
    $region13: #{discriminator_forward.1} parent=1 // pred_fallthru
      _
    // Predicated region
    $region14: #{discriminator_forward.1} parent=1 // pred_check
      _
    $region15: #{discriminator_forward.1} parent=1 // pred_check_branch
      %33 = sbr.rel (0) target = $region17
    $region16: #{discriminator_forward.1} parent=1 // pred_region
      %s35 = ssub.s32 16384, 16384
      %36 = vsyncadd [#allocation5], %s35
      %s37 = sshll.u32 [#allocation4], 4
      %s38 = int_to_ptr.vmem [resolvable:$true] %s37
      %43 = dma.hbm_to_vmem [thread:$0]  %s3, 16384, %s38, [#allocation5], 256, 256, 16
    $region17: #{discriminator_forward.1} parent=1 // pred_fallthru
      _
    // Predicated region
    $region18: #{discriminator_forward.1} parent=1 // pred_check
      _
    $region19: #{discriminator_forward.1} parent=1 // pred_check_branch
      %45 = sbr.rel (0) target = $region21
    $region20: #{discriminator_forward.1} parent=1 // pred_region
      _
    $region21: #{discriminator_forward.1} parent=1 // pred_fallthru
      _
    // Predicated region
    $region22: #{discriminator_forward.1} parent=1 // pred_check
      _
    $region23: #{discriminator_forward.1} parent=1 // pred_check_branch
      %47 = sbr.rel (0) target = $region25
    $region24: #{discriminator_forward.1} parent=1 // pred_region
      %s49 = ssub.s32 16384, 16384
      %50 = vsyncadd [#allocation5], %s49
      %s51 = sshll.u32 [#allocation6], 4
      %s52 = int_to_ptr.vmem [resolvable:$true] %s51
      %57 = dma.hbm_to_vmem [thread:$0]  %s5, 16384, %s52, [#allocation5], 256, 256, 16
    $region25: #{discriminator_forward.1} parent=1 // pred_fallthru
      _
    // Predicated region
    $region26: #{discriminator_forward.1} parent=1 // pred_check
      _
    $region27: #{discriminator_forward.1} parent=1 // pred_check_branch
      %59 = sbr.rel (0) target = $region29
    $region28: #{discriminator_forward.1} parent=1 // pred_region
      _
    $region29: #{discriminator_forward.1} parent=1 // pred_fallthru
      _
    // Predicated region
    $region30: #{discriminator_forward.1} parent=1 // pred_check
      _
    $region31: #{discriminator_forward.1} parent=1 // pred_check_branch
      %61 = sbr.rel (0) target = $region33
    $region32: #{discriminator_forward.1} parent=1 // pred_region
      _
    $region33: #{discriminator_forward.1} parent=1 // pred_fallthru
      _
    // Predicated region
    $region34: #{discriminator_forward.1} parent=1 // pred_check
      _
    $region35: #{discriminator_forward.1} parent=1 // pred_check_branch
      %63 = sbr.rel (0) target = $region37
    $region36: #{discriminator_forward.1} parent=1 // pred_region
      _
    $region37: #{discriminator_forward.1} parent=1 // pred_fallthru
      _
    // Predicated region
    $region38: #{discriminator_forward.1} parent=1 // pred_check
      _
    $region39: #{discriminator_forward.1} parent=1 // pred_check_branch
      %65 = sbr.rel (0) target = $region41
    $region40: #{discriminator_forward.1} parent=1 // pred_region
      %66 = dma.done [#allocation3], 8192
    $region41: #{discriminator_forward.1} parent=1 // pred_fallthru
      _
    // Predicated region
    $region42: #{discriminator_forward.1} parent=1 // pred_check
      _
    $region43: #{discriminator_forward.1} parent=1 // pred_check_branch
      %68 = sbr.rel (0) target = $region45
    $region44: #{discriminator_forward.1} parent=1 // pred_region
      %69 = dma.done [#allocation5], 16384
    $region45: #{discriminator_forward.1} parent=1 // pred_fallthru
      _
    // Predicated region
    $region46: #{discriminator_forward.1} parent=1 // pred_check
      _
    $region47: #{discriminator_forward.1} parent=1 // pred_check_branch
      %71 = sbr.rel (0) target = $region49
    $region48: #{discriminator_forward.1} parent=1 // pred_region
      %72 = dma.done [#allocation5], 16384
    $region49: #{discriminator_forward.1} parent=1 // pred_fallthru
      _
    %v74 = vld [vmem:[%s0] sm:$0xff]
    %v75 = vld [vmem:[%s0 + $0x8] sm:$0xff]
    %v76 = vpack.c.bf16 %v74, %v74
    %v77 = vpack.c.bf16 %v75, %v75
    %v78 = vld [vmem:[#allocation2] sm:$0xff]
    %v79 = vld [vmem:[#allocation2 + $0x8] sm:$0xff]
    %v80 = vld [vmem:[#allocation2 + $0x10] sm:$0xff]
    %v81 = vld [vmem:[#allocation2 + $0x18] sm:$0xff]
    %v82 = vld [vmem:[#allocation2 + $0x20] sm:$0xff]
    %v83 = vld [vmem:[#allocation2 + $0x28] sm:$0xff]
    %v84 = vld [vmem:[#allocation2 + $0x30] sm:$0xff]
    %v85 = vld [vmem:[#allocation2 + $0x38] sm:$0xff]
    %v86 = vld [vmem:[#allocation2 + $0x40] sm:$0xff]
    %v87 = vld [vmem:[#allocation2 + $0x48] sm:$0xff]
    %v88 = vld [vmem:[#allocation2 + $0x50] sm:$0xff]
    %v89 = vld [vmem:[#allocation2 + $0x58] sm:$0xff]
    %v90 = vld [vmem:[#allocation2 + $0x60] sm:$0xff]
    %v91 = vld [vmem:[#allocation2 + $0x68] sm:$0xff]
    %v92 = vld [vmem:[#allocation2 + $0x70] sm:$0xff]
    %v93 = vld [vmem:[#allocation2 + $0x78] sm:$0xff]
    %v94 = vld [vmem:[#allocation2 + $0x80] sm:$0xff]
    %v95 = vld [vmem:[#allocation2 + $0x88] sm:$0xff]
    %v96 = vld [vmem:[#allocation2 + $0x90] sm:$0xff]
    %v97 = vld [vmem:[#allocation2 + $0x98] sm:$0xff]
    %v98 = vld [vmem:[#allocation2 + $0xa0] sm:$0xff]
    %v99 = vld [vmem:[#allocation2 + $0xa8] sm:$0xff]
    %v100 = vld [vmem:[#allocation2 + $0xb0] sm:$0xff]
    %v101 = vld [vmem:[#allocation2 + $0xb8] sm:$0xff]
    %v102 = vld [vmem:[#allocation2 + $0xc0] sm:$0xff]
    %v103 = vld [vmem:[#allocation2 + $0xc8] sm:$0xff]
    %v104 = vld [vmem:[#allocation2 + $0xd0] sm:$0xff]
    %v105 = vld [vmem:[#allocation2 + $0xd8] sm:$0xff]
    %v106 = vld [vmem:[#allocation2 + $0xe0] sm:$0xff]
    %v107 = vld [vmem:[#allocation2 + $0xe8] sm:$0xff]
    %v108 = vld [vmem:[#allocation2 + $0xf0] sm:$0xff]
    %v109 = vld [vmem:[#allocation2 + $0xf8] sm:$0xff]
    %v110 = vld [vmem:[#allocation2 + $0x100] sm:$0xff]
    %v111 = vld [vmem:[#allocation2 + $0x108] sm:$0xff]
    %v112 = vld [vmem:[#allocation2 + $0x110] sm:$0xff]
    %v113 = vld [vmem:[#allocation2 + $0x118] sm:$0xff]
    %v114 = vld [vmem:[#allocation2 + $0x120] sm:$0xff]
    %v115 = vld [vmem:[#allocation2 + $0x128] sm:$0xff]
    %v116 = vld [vmem:[#allocation2 + $0x130] sm:$0xff]
    %v117 = vld [vmem:[#allocation2 + $0x138] sm:$0xff]
    %v118 = vld [vmem:[#allocation2 + $0x140] sm:$0xff]
    %v119 = vld [vmem:[#allocation2 + $0x148] sm:$0xff]
    %v120 = vld [vmem:[#allocation2 + $0x150] sm:$0xff]
    %v121 = vld [vmem:[#allocation2 + $0x158] sm:$0xff]
    %v122 = vld [vmem:[#allocation2 + $0x160] sm:$0xff]
    %v123 = vld [vmem:[#allocation2 + $0x168] sm:$0xff]
    %v124 = vld [vmem:[#allocation2 + $0x170] sm:$0xff]
    %v125 = vld [vmem:[#allocation2 + $0x178] sm:$0xff]
    %v126 = vld [vmem:[#allocation2 + $0x180] sm:$0xff]
    %v127 = vld [vmem:[#allocation2 + $0x188] sm:$0xff]
    %v128 = vld [vmem:[#allocation2 + $0x190] sm:$0xff]
    %v129 = vld [vmem:[#allocation2 + $0x198] sm:$0xff]
    %v130 = vld [vmem:[#allocation2 + $0x1a0] sm:$0xff]
    %v131 = vld [vmem:[#allocation2 + $0x1a8] sm:$0xff]
    %v132 = vld [vmem:[#allocation2 + $0x1b0] sm:$0xff]
    %v133 = vld [vmem:[#allocation2 + $0x1b8] sm:$0xff]
    %v134 = vld [vmem:[#allocation2 + $0x1c0] sm:$0xff]
    %v135 = vld [vmem:[#allocation2 + $0x1c8] sm:$0xff]
    %v136 = vld [vmem:[#allocation2 + $0x1d0] sm:$0xff]
    %v137 = vld [vmem:[#allocation2 + $0x1d8] sm:$0xff]
    %v138 = vld [vmem:[#allocation2 + $0x1e0] sm:$0xff]
    %v139 = vld [vmem:[#allocation2 + $0x1e8] sm:$0xff]
    %v140 = vld [vmem:[#allocation2 + $0x1f0] sm:$0xff]
    %v141 = vld [vmem:[#allocation2 + $0x1f8] sm:$0xff]
    %v142 = vld [vmem:[%s1] sm:$0xff]
    %v143 = vld [vmem:[%s1 + $0x8] sm:$0xff]
    %v144 = vld [vmem:[%s1 + $0x10] sm:$0xff]
    %v145 = vld [vmem:[%s1 + $0x18] sm:$0xff]
    %v210 = vunpack.c.l.b16 %v78
    %v211 = vunpack.c.h.b16 %v78
    %v212 = vunpack.c.l.b16 %v79
    %v213 = vunpack.c.h.b16 %v79
    %v214 = vunpack.c.l.b16 %v80
    %v215 = vunpack.c.h.b16 %v80
    %v216 = vunpack.c.l.b16 %v81
    %v217 = vunpack.c.h.b16 %v81
    %v218 = vunpack.c.l.b16 %v82
    %v219 = vunpack.c.h.b16 %v82
    %v220 = vunpack.c.l.b16 %v83
    %v221 = vunpack.c.h.b16 %v83
    %v222 = vunpack.c.l.b16 %v84
    %v223 = vunpack.c.h.b16 %v84
    %v224 = vunpack.c.l.b16 %v85
    %v225 = vunpack.c.h.b16 %v85
    %v226 = vunpack.c.l.b16 %v86
    %v227 = vunpack.c.h.b16 %v86
    %v228 = vunpack.c.l.b16 %v87
    %v229 = vunpack.c.h.b16 %v87
    %v230 = vunpack.c.l.b16 %v88
    %v231 = vunpack.c.h.b16 %v88
    %v232 = vunpack.c.l.b16 %v89
    %v233 = vunpack.c.h.b16 %v89
    %v234 = vunpack.c.l.b16 %v90
    %v235 = vunpack.c.h.b16 %v90
    %v236 = vunpack.c.l.b16 %v91
    %v237 = vunpack.c.h.b16 %v91
    %v238 = vunpack.c.l.b16 %v92
    %v239 = vunpack.c.h.b16 %v92
    %v240 = vunpack.c.l.b16 %v93
    %v241 = vunpack.c.h.b16 %v93
    %v242 = vunpack.c.l.b16 %v94
    %v243 = vunpack.c.h.b16 %v94
    %v244 = vunpack.c.l.b16 %v95
    %v245 = vunpack.c.h.b16 %v95
    %v246 = vunpack.c.l.b16 %v96
    %v247 = vunpack.c.h.b16 %v96
    %v248 = vunpack.c.l.b16 %v97
    %v249 = vunpack.c.h.b16 %v97
    %v250 = vunpack.c.l.b16 %v98
    %v251 = vunpack.c.h.b16 %v98
    %v252 = vunpack.c.l.b16 %v99
    %v253 = vunpack.c.h.b16 %v99
    %v254 = vunpack.c.l.b16 %v100
    %v255 = vunpack.c.h.b16 %v100
    %v256 = vunpack.c.l.b16 %v101
    %v257 = vunpack.c.h.b16 %v101
    %v258 = vunpack.c.l.b16 %v102
    %v259 = vunpack.c.h.b16 %v102
    %v260 = vunpack.c.l.b16 %v103
    %v261 = vunpack.c.h.b16 %v103
    %v262 = vunpack.c.l.b16 %v104
    %v263 = vunpack.c.h.b16 %v104
    %v264 = vunpack.c.l.b16 %v105
    %v265 = vunpack.c.h.b16 %v105
    %v266 = vunpack.c.l.b16 %v106
    %v267 = vunpack.c.h.b16 %v106
    %v268 = vunpack.c.l.b16 %v107
    %v269 = vunpack.c.h.b16 %v107
    %v270 = vunpack.c.l.b16 %v108
    %v271 = vunpack.c.h.b16 %v108
    %v272 = vunpack.c.l.b16 %v109
    %v273 = vunpack.c.h.b16 %v109
    %v274 = vunpack.c.l.b16 %v110
    %v275 = vunpack.c.h.b16 %v110
    %v276 = vunpack.c.l.b16 %v111
    %v277 = vunpack.c.h.b16 %v111
    %v278 = vunpack.c.l.b16 %v112
    %v279 = vunpack.c.h.b16 %v112
    %v280 = vunpack.c.l.b16 %v113
    %v281 = vunpack.c.h.b16 %v113
    %v282 = vunpack.c.l.b16 %v114
    %v283 = vunpack.c.h.b16 %v114
    %v284 = vunpack.c.l.b16 %v115
    %v285 = vunpack.c.h.b16 %v115
    %v286 = vunpack.c.l.b16 %v116
    %v287 = vunpack.c.h.b16 %v116
    %v288 = vunpack.c.l.b16 %v117
    %v289 = vunpack.c.h.b16 %v117
    %v290 = vunpack.c.l.b16 %v118
    %v291 = vunpack.c.h.b16 %v118
    %v292 = vunpack.c.l.b16 %v119
    %v293 = vunpack.c.h.b16 %v119
    %v294 = vunpack.c.l.b16 %v120
    %v295 = vunpack.c.h.b16 %v120
    %v296 = vunpack.c.l.b16 %v121
    %v297 = vunpack.c.h.b16 %v121
    %v298 = vunpack.c.l.b16 %v122
    %v299 = vunpack.c.h.b16 %v122
    %v300 = vunpack.c.l.b16 %v123
    %v301 = vunpack.c.h.b16 %v123
    %v302 = vunpack.c.l.b16 %v124
    %v303 = vunpack.c.h.b16 %v124
    %v304 = vunpack.c.l.b16 %v125
    %v305 = vunpack.c.h.b16 %v125
    %v306 = vunpack.c.l.b16 %v126
    %v307 = vunpack.c.h.b16 %v126
    %v308 = vunpack.c.l.b16 %v127
    %v309 = vunpack.c.h.b16 %v127
    %v310 = vunpack.c.l.b16 %v128
    %v311 = vunpack.c.h.b16 %v128
    %v312 = vunpack.c.l.b16 %v129
    %v313 = vunpack.c.h.b16 %v129
    %v314 = vunpack.c.l.b16 %v130
    %v315 = vunpack.c.h.b16 %v130
    %v316 = vunpack.c.l.b16 %v131
    %v317 = vunpack.c.h.b16 %v131
    %v318 = vunpack.c.l.b16 %v132
    %v319 = vunpack.c.h.b16 %v132
    %v320 = vunpack.c.l.b16 %v133
    %v321 = vunpack.c.h.b16 %v133
    %v322 = vunpack.c.l.b16 %v134
    %v323 = vunpack.c.h.b16 %v134
    %v324 = vunpack.c.l.b16 %v135
    %v325 = vunpack.c.h.b16 %v135
    %v326 = vunpack.c.l.b16 %v136
    %v327 = vunpack.c.h.b16 %v136
    %v328 = vunpack.c.l.b16 %v137
    %v329 = vunpack.c.h.b16 %v137
    %v330 = vunpack.c.l.b16 %v138
    %v331 = vunpack.c.h.b16 %v138
    %v332 = vunpack.c.l.b16 %v139
    %v333 = vunpack.c.h.b16 %v139
    %v334 = vunpack.c.l.b16 %v140
    %v335 = vunpack.c.h.b16 %v140
    %v336 = vunpack.c.l.b16 %v141
    %v337 = vunpack.c.h.b16 %v141
    %v338 = vpack.c.b16 %v214, %v210
    %v339 = vpack.c.b16 %v215, %v211
    %v340 = vpack.c.b16 %v216, %v212
    %v341 = vpack.c.b16 %v217, %v213
    %v342 = vpack.c.b16 %v222, %v218
    %v343 = vpack.c.b16 %v223, %v219
    %v344 = vpack.c.b16 %v224, %v220
    %v345 = vpack.c.b16 %v225, %v221
    %v346 = vpack.c.b16 %v230, %v226
    %v347 = vpack.c.b16 %v231, %v227
    %v348 = vpack.c.b16 %v232, %v228
    %v349 = vpack.c.b16 %v233, %v229
    %v350 = vpack.c.b16 %v238, %v234
    %v351 = vpack.c.b16 %v239, %v235
    %v352 = vpack.c.b16 %v240, %v236
    %v353 = vpack.c.b16 %v241, %v237
    %v354 = vpack.c.b16 %v246, %v242
    %v355 = vpack.c.b16 %v247, %v243
    %v356 = vpack.c.b16 %v248, %v244
    %v357 = vpack.c.b16 %v249, %v245
    %v358 = vpack.c.b16 %v254, %v250
    %v359 = vpack.c.b16 %v255, %v251
    %v360 = vpack.c.b16 %v256, %v252
    %v361 = vpack.c.b16 %v257, %v253
    %v362 = vpack.c.b16 %v262, %v258
    %v363 = vpack.c.b16 %v263, %v259
    %v364 = vpack.c.b16 %v264, %v260
    %v365 = vpack.c.b16 %v265, %v261
    %v366 = vpack.c.b16 %v270, %v266
    %v367 = vpack.c.b16 %v271, %v267
    %v368 = vpack.c.b16 %v272, %v268
    %v369 = vpack.c.b16 %v273, %v269
    %v370 = vpack.c.b16 %v278, %v274
    %v371 = vpack.c.b16 %v279, %v275
    %v372 = vpack.c.b16 %v280, %v276
    %v373 = vpack.c.b16 %v281, %v277
    %v374 = vpack.c.b16 %v286, %v282
    %v375 = vpack.c.b16 %v287, %v283
    %v376 = vpack.c.b16 %v288, %v284
    %v377 = vpack.c.b16 %v289, %v285
    %v378 = vpack.c.b16 %v294, %v290
    %v379 = vpack.c.b16 %v295, %v291
    %v380 = vpack.c.b16 %v296, %v292
    %v381 = vpack.c.b16 %v297, %v293
    %v382 = vpack.c.b16 %v302, %v298
    %v383 = vpack.c.b16 %v303, %v299
    %v384 = vpack.c.b16 %v304, %v300
    %v385 = vpack.c.b16 %v305, %v301
    %v386 = vpack.c.b16 %v310, %v306
    %v387 = vpack.c.b16 %v311, %v307
    %v388 = vpack.c.b16 %v312, %v308
    %v389 = vpack.c.b16 %v313, %v309
    %v390 = vpack.c.b16 %v318, %v314
    %v391 = vpack.c.b16 %v319, %v315
    %v392 = vpack.c.b16 %v320, %v316
    %v393 = vpack.c.b16 %v321, %v317
    %v394 = vpack.c.b16 %v326, %v322
    %v395 = vpack.c.b16 %v327, %v323
    %v396 = vpack.c.b16 %v328, %v324
    %v397 = vpack.c.b16 %v329, %v325
    %v398 = vpack.c.b16 %v334, %v330
    %v399 = vpack.c.b16 %v335, %v331
    %v400 = vpack.c.b16 %v336, %v332
    %v401 = vpack.c.b16 %v337, %v333
    %466 = vmatprep.subr.bf16.mxu0 %v367
    %467 = vmatpush1.bf16.msra.mxu0 %v366
    %468 = vmatprep.subr.bf16.mxu0 %v363
    %469 = vmatpush1.bf16.msra.mxu0 %v362
    %470 = vmatprep.subr.bf16.mxu0 %v359
    %471 = vmatpush1.bf16.msra.mxu0 %v358
    %472 = vmatprep.subr.bf16.mxu0 %v355
    %473 = vmatpush1.bf16.msra.mxu0 %v354
    %474 = vmatprep.subr.bf16.mxu0 %v351
    %475 = vmatpush1.bf16.msra.mxu0 %v350
    %476 = vmatprep.subr.bf16.mxu0 %v347
    %477 = vmatpush1.bf16.msra.mxu0 %v346
    %478 = vmatprep.subr.bf16.mxu0 %v343
    %479 = vmatpush1.bf16.msra.mxu0 %v342
    %480 = vmatprep.subr.bf16.mxu0 %v339
    %481 = vmatpush1.bf16.msra.mxu0 %v338
    %482 = vmatprep.subr.bf16.mxu0 %v399
    %483 = vmatpush2.bf16.msra.mxu0 %v398
    %484 = vmatprep.subr.bf16.mxu0 %v395
    %485 = vmatpush2.bf16.msra.mxu0 %v394
    %486 = vmatprep.subr.bf16.mxu0 %v391
    %487 = vmatpush2.bf16.msra.mxu0 %v390
    %488 = vmatprep.subr.bf16.mxu0 %v387
    %489 = vmatpush2.bf16.msra.mxu0 %v386
    %490 = vmatprep.subr.bf16.mxu0 %v383
    %491 = vmatpush2.bf16.msra.mxu0 %v382
    %492 = vmatprep.subr.bf16.mxu0 %v379
    %493 = vmatpush2.bf16.msra.mxu0 %v378
    %494 = vmatprep.subr.bf16.mxu0 %v375
    %495 = vmatpush2.bf16.msra.mxu0 %v374
    %496 = vmatprep.subr.bf16.mxu0 %v371
    %497 = vmatpush2.bf16.msra.mxu0 %v370
    %498 = vmatprep.mubr.bf16.mxu0 %v77
    %499 = vmatmul.mubr.bf16.gmra.mxu0 %v76
    %v500 = vpop.f32.mrf.mxu0
    %v501 = vadd.f32 %v142, %v500
    %v502 = vpop.f32.mrf.mxu0
    %v503 = vadd.f32 %v143, %v502
    %v504 = vpop.f32.mrf.mxu0
    %v505 = vpop.f32.mrf.mxu0
    %506 = vdwg.mxu0
    %507 = vmatprep.subr.bf16.mxu0 %v369
    %508 = vmatpush1.bf16.msra.mxu0 %v368
    %509 = vmatprep.subr.bf16.mxu0 %v365
    %510 = vmatpush1.bf16.msra.mxu0 %v364
    %511 = vmatprep.subr.bf16.mxu0 %v361
    %512 = vmatpush1.bf16.msra.mxu0 %v360
    %513 = vmatprep.subr.bf16.mxu0 %v357
    %514 = vmatpush1.bf16.msra.mxu0 %v356
    %515 = vmatprep.subr.bf16.mxu0 %v353
    %516 = vmatpush1.bf16.msra.mxu0 %v352
    %517 = vmatprep.subr.bf16.mxu0 %v349
    %518 = vmatpush1.bf16.msra.mxu0 %v348
    %519 = vmatprep.subr.bf16.mxu0 %v345
    %520 = vmatpush1.bf16.msra.mxu0 %v344
    %521 = vmatprep.subr.bf16.mxu0 %v341
    %522 = vmatpush1.bf16.msra.mxu0 %v340
    %523 = vmatprep.subr.bf16.mxu0 %v401
    %524 = vmatpush2.bf16.msra.mxu0 %v400
    %525 = vmatprep.subr.bf16.mxu0 %v397
    %526 = vmatpush2.bf16.msra.mxu0 %v396
    %527 = vmatprep.subr.bf16.mxu0 %v393
    %528 = vmatpush2.bf16.msra.mxu0 %v392
    %529 = vmatprep.subr.bf16.mxu0 %v389
    %530 = vmatpush2.bf16.msra.mxu0 %v388
    %531 = vmatprep.subr.bf16.mxu0 %v385
    %532 = vmatpush2.bf16.msra.mxu0 %v384
    %533 = vmatprep.subr.bf16.mxu0 %v381
    %534 = vmatpush2.bf16.msra.mxu0 %v380
    %535 = vmatprep.subr.bf16.mxu0 %v377
    %536 = vmatpush2.bf16.msra.mxu0 %v376
    %537 = vmatprep.subr.bf16.mxu0 %v373
    %538 = vmatpush2.bf16.msra.mxu0 %v372
    %539 = vmatprep.mubr.bf16.mxu0 %v77
    %540 = vmatmul.mubr.bf16.gmra.mxu0 %v76
    %v541 = vpop.f32.mrf.mxu0
    %v542 = vadd.f32 %v144, %v541
    %v543 = vpop.f32.mrf.mxu0
    %v544 = vadd.f32 %v145, %v543
    %v545 = vpop.f32.mrf.mxu0
    %v546 = vpop.f32.mrf.mxu0
    %547 = vdwg.mxu0
    %v548 = vmul.f32 %v501, 0.2
    %v549 = vmul.f32 %v503, 0.2
    %v550 = vmul.f32 %v542, 0.2
    %v551 = vmul.f32 %v544, 0.2
    %v552 = vmax.f32 %v501, %v548
    %v553 = vmax.f32 %v503, %v549
    %v554 = vmax.f32 %v542, %v550
    %v555 = vmax.f32 %v544, %v551
    %v556 = vpack.c.bf16 %v552, %v552
    %v557 = vpack.c.bf16 %v553, %v553
    %v558 = vpack.c.bf16 %v554, %v554
    %v559 = vpack.c.bf16 %v555, %v555
    %v560 = vld [vmem:[#allocation4] sm:$0xff]
    %v561 = vld [vmem:[#allocation4 + $0x8] sm:$0xff]
    %v562 = vld [vmem:[#allocation4 + $0x10] sm:$0xff]
    %v563 = vld [vmem:[#allocation4 + $0x18] sm:$0xff]
    %v564 = vld [vmem:[#allocation4 + $0x20] sm:$0xff]
    %v565 = vld [vmem:[#allocation4 + $0x28] sm:$0xff]
    %v566 = vld [vmem:[#allocation4 + $0x30] sm:$0xff]
    %v567 = vld [vmem:[#allocation4 + $0x38] sm:$0xff]
    %v568 = vld [vmem:[#allocation4 + $0x40] sm:$0xff]
    %v569 = vld [vmem:[#allocation4 + $0x48] sm:$0xff]
    %v570 = vld [vmem:[#allocation4 + $0x50] sm:$0xff]
    %v571 = vld [vmem:[#allocation4 + $0x58] sm:$0xff]
    %v572 = vld [vmem:[#allocation4 + $0x60] sm:$0xff]
    %v573 = vld [vmem:[#allocation4 + $0x68] sm:$0xff]
    %v574 = vld [vmem:[#allocation4 + $0x70] sm:$0xff]
    %v575 = vld [vmem:[#allocation4 + $0x78] sm:$0xff]
    %v576 = vld [vmem:[#allocation4 + $0x80] sm:$0xff]
    %v577 = vld [vmem:[#allocation4 + $0x88] sm:$0xff]
    %v578 = vld [vmem:[#allocation4 + $0x90] sm:$0xff]
    %v579 = vld [vmem:[#allocation4 + $0x98] sm:$0xff]
    %v580 = vld [vmem:[#allocation4 + $0xa0] sm:$0xff]
    %v581 = vld [vmem:[#allocation4 + $0xa8] sm:$0xff]
    %v582 = vld [vmem:[#allocation4 + $0xb0] sm:$0xff]
    %v583 = vld [vmem:[#allocation4 + $0xb8] sm:$0xff]
    %v584 = vld [vmem:[#allocation4 + $0xc0] sm:$0xff]
    %v585 = vld [vmem:[#allocation4 + $0xc8] sm:$0xff]
    %v586 = vld [vmem:[#allocation4 + $0xd0] sm:$0xff]
    %v587 = vld [vmem:[#allocation4 + $0xd8] sm:$0xff]
    %v588 = vld [vmem:[#allocation4 + $0xe0] sm:$0xff]
    %v589 = vld [vmem:[#allocation4 + $0xe8] sm:$0xff]
    %v590 = vld [vmem:[#allocation4 + $0xf0] sm:$0xff]
    %v591 = vld [vmem:[#allocation4 + $0xf8] sm:$0xff]
    %v592 = vld [vmem:[#allocation4 + $0x100] sm:$0xff]
    %v593 = vld [vmem:[#allocation4 + $0x108] sm:$0xff]
    %v594 = vld [vmem:[#allocation4 + $0x110] sm:$0xff]
    %v595 = vld [vmem:[#allocation4 + $0x118] sm:$0xff]
    %v596 = vld [vmem:[#allocation4 + $0x120] sm:$0xff]
    %v597 = vld [vmem:[#allocation4 + $0x128] sm:$0xff]
    %v598 = vld [vmem:[#allocation4 + $0x130] sm:$0xff]
    %v599 = vld [vmem:[#allocation4 + $0x138] sm:$0xff]
    %v600 = vld [vmem:[#allocation4 + $0x140] sm:$0xff]
    %v601 = vld [vmem:[#allocation4 + $0x148] sm:$0xff]
    %v602 = vld [vmem:[#allocation4 + $0x150] sm:$0xff]
    %v603 = vld [vmem:[#allocation4 + $0x158] sm:$0xff]
    %v604 = vld [vmem:[#allocation4 + $0x160] sm:$0xff]
    %v605 = vld [vmem:[#allocation4 + $0x168] sm:$0xff]
    %v606 = vld [vmem:[#allocation4 + $0x170] sm:$0xff]
    %v607 = vld [vmem:[#allocation4 + $0x178] sm:$0xff]
    %v608 = vld [vmem:[#allocation4 + $0x180] sm:$0xff]
    %v609 = vld [vmem:[#allocation4 + $0x188] sm:$0xff]
    %v610 = vld [vmem:[#allocation4 + $0x190] sm:$0xff]
    %v611 = vld [vmem:[#allocation4 + $0x198] sm:$0xff]
    %v612 = vld [vmem:[#allocation4 + $0x1a0] sm:$0xff]
    %v613 = vld [vmem:[#allocation4 + $0x1a8] sm:$0xff]
    %v614 = vld [vmem:[#allocation4 + $0x1b0] sm:$0xff]
    %v615 = vld [vmem:[#allocation4 + $0x1b8] sm:$0xff]
    %v616 = vld [vmem:[#allocation4 + $0x1c0] sm:$0xff]
    %v617 = vld [vmem:[#allocation4 + $0x1c8] sm:$0xff]
    %v618 = vld [vmem:[#allocation4 + $0x1d0] sm:$0xff]
    %v619 = vld [vmem:[#allocation4 + $0x1d8] sm:$0xff]
    %v620 = vld [vmem:[#allocation4 + $0x1e0] sm:$0xff]
    %v621 = vld [vmem:[#allocation4 + $0x1e8] sm:$0xff]
    %v622 = vld [vmem:[#allocation4 + $0x1f0] sm:$0xff]
    %v623 = vld [vmem:[#allocation4 + $0x1f8] sm:$0xff]
    %v624 = vld [vmem:[#allocation4 + $0x200] sm:$0xff]
    %v625 = vld [vmem:[#allocation4 + $0x208] sm:$0xff]
    %v626 = vld [vmem:[#allocation4 + $0x210] sm:$0xff]
    %v627 = vld [vmem:[#allocation4 + $0x218] sm:$0xff]
    %v628 = vld [vmem:[#allocation4 + $0x220] sm:$0xff]
    %v629 = vld [vmem:[#allocation4 + $0x228] sm:$0xff]
    %v630 = vld [vmem:[#allocation4 + $0x230] sm:$0xff]
    %v631 = vld [vmem:[#allocation4 + $0x238] sm:$0xff]
    %v632 = vld [vmem:[#allocation4 + $0x240] sm:$0xff]
    %v633 = vld [vmem:[#allocation4 + $0x248] sm:$0xff]
    %v634 = vld [vmem:[#allocation4 + $0x250] sm:$0xff]
    %v635 = vld [vmem:[#allocation4 + $0x258] sm:$0xff]
    %v636 = vld [vmem:[#allocation4 + $0x260] sm:$0xff]
    %v637 = vld [vmem:[#allocation4 + $0x268] sm:$0xff]
    %v638 = vld [vmem:[#allocation4 + $0x270] sm:$0xff]
    %v639 = vld [vmem:[#allocation4 + $0x278] sm:$0xff]
    %v640 = vld [vmem:[#allocation4 + $0x280] sm:$0xff]
    %v641 = vld [vmem:[#allocation4 + $0x288] sm:$0xff]
    %v642 = vld [vmem:[#allocation4 + $0x290] sm:$0xff]
    %v643 = vld [vmem:[#allocation4 + $0x298] sm:$0xff]
    %v644 = vld [vmem:[#allocation4 + $0x2a0] sm:$0xff]
    %v645 = vld [vmem:[#allocation4 + $0x2a8] sm:$0xff]
    %v646 = vld [vmem:[#allocation4 + $0x2b0] sm:$0xff]
    %v647 = vld [vmem:[#allocation4 + $0x2b8] sm:$0xff]
    %v648 = vld [vmem:[#allocation4 + $0x2c0] sm:$0xff]
    %v649 = vld [vmem:[#allocation4 + $0x2c8] sm:$0xff]
    %v650 = vld [vmem:[#allocation4 + $0x2d0] sm:$0xff]
    %v651 = vld [vmem:[#allocation4 + $0x2d8] sm:$0xff]
    %v652 = vld [vmem:[#allocation4 + $0x2e0] sm:$0xff]
    %v653 = vld [vmem:[#allocation4 + $0x2e8] sm:$0xff]
    %v654 = vld [vmem:[#allocation4 + $0x2f0] sm:$0xff]
    %v655 = vld [vmem:[#allocation4 + $0x2f8] sm:$0xff]
    %v656 = vld [vmem:[#allocation4 + $0x300] sm:$0xff]
    %v657 = vld [vmem:[#allocation4 + $0x308] sm:$0xff]
    %v658 = vld [vmem:[#allocation4 + $0x310] sm:$0xff]
    %v659 = vld [vmem:[#allocation4 + $0x318] sm:$0xff]
    %v660 = vld [vmem:[#allocation4 + $0x320] sm:$0xff]
    %v661 = vld [vmem:[#allocation4 + $0x328] sm:$0xff]
    %v662 = vld [vmem:[#allocation4 + $0x330] sm:$0xff]
    %v663 = vld [vmem:[#allocation4 + $0x338] sm:$0xff]
    %v664 = vld [vmem:[#allocation4 + $0x340] sm:$0xff]
    %v665 = vld [vmem:[#allocation4 + $0x348] sm:$0xff]
    %v666 = vld [vmem:[#allocation4 + $0x350] sm:$0xff]
    %v667 = vld [vmem:[#allocation4 + $0x358] sm:$0xff]
    %v668 = vld [vmem:[#allocation4 + $0x360] sm:$0xff]
    %v669 = vld [vmem:[#allocation4 + $0x368] sm:$0xff]
    %v670 = vld [vmem:[#allocation4 + $0x370] sm:$0xff]
    %v671 = vld [vmem:[#allocation4 + $0x378] sm:$0xff]
    %v672 = vld [vmem:[#allocation4 + $0x380] sm:$0xff]
    %v673 = vld [vmem:[#allocation4 + $0x388] sm:$0xff]
    %v674 = vld [vmem:[#allocation4 + $0x390] sm:$0xff]
    %v675 = vld [vmem:[#allocation4 + $0x398] sm:$0xff]
    %v676 = vld [vmem:[#allocation4 + $0x3a0] sm:$0xff]
    %v677 = vld [vmem:[#allocation4 + $0x3a8] sm:$0xff]
    %v678 = vld [vmem:[#allocation4 + $0x3b0] sm:$0xff]
    %v679 = vld [vmem:[#allocation4 + $0x3b8] sm:$0xff]
    %v680 = vld [vmem:[#allocation4 + $0x3c0] sm:$0xff]
    %v681 = vld [vmem:[#allocation4 + $0x3c8] sm:$0xff]
    %v682 = vld [vmem:[#allocation4 + $0x3d0] sm:$0xff]
    %v683 = vld [vmem:[#allocation4 + $0x3d8] sm:$0xff]
    %v684 = vld [vmem:[#allocation4 + $0x3e0] sm:$0xff]
    %v685 = vld [vmem:[#allocation4 + $0x3e8] sm:$0xff]
    %v686 = vld [vmem:[#allocation4 + $0x3f0] sm:$0xff]
    %v687 = vld [vmem:[#allocation4 + $0x3f8] sm:$0xff]
    %v688 = vld [vmem:[%s4] sm:$0xf]
    %v690 = vlaneseq
    %v691 = vshrl.u32 %v690, 7
    %v692 = vsub.s32 0, %v691
    %v693 = vrot.slane %v688, %v692
    %v694 = vlaneseq
    %v695 = vshrl.u32 %v694, 7
    %v696 = vsub.s32 1, %v695
    %v697 = vrot.slane %v688, %v696
    %v698 = vlaneseq
    %v699 = vshrl.u32 %v698, 7
    %v700 = vsub.s32 2, %v699
    %v701 = vrot.slane %v688, %v700
    %v702 = vlaneseq
    %v703 = vshrl.u32 %v702, 7
    %v704 = vsub.s32 3, %v703
    %v705 = vrot.slane %v688, %v704
    %v838 = vunpack.c.l.b16 %v560
    %v839 = vunpack.c.h.b16 %v560
    %v840 = vunpack.c.l.b16 %v561
    %v841 = vunpack.c.h.b16 %v561
    %v842 = vunpack.c.l.b16 %v562
    %v843 = vunpack.c.h.b16 %v562
    %v844 = vunpack.c.l.b16 %v563
    %v845 = vunpack.c.h.b16 %v563
    %v846 = vunpack.c.l.b16 %v564
    %v847 = vunpack.c.h.b16 %v564
    %v848 = vunpack.c.l.b16 %v565
    %v849 = vunpack.c.h.b16 %v565
    %v850 = vunpack.c.l.b16 %v566
    %v851 = vunpack.c.h.b16 %v566
    %v852 = vunpack.c.l.b16 %v567
    %v853 = vunpack.c.h.b16 %v567
    %v854 = vunpack.c.l.b16 %v568
    %v855 = vunpack.c.h.b16 %v568
    %v856 = vunpack.c.l.b16 %v569
    %v857 = vunpack.c.h.b16 %v569
    %v858 = vunpack.c.l.b16 %v570
    %v859 = vunpack.c.h.b16 %v570
    %v860 = vunpack.c.l.b16 %v571
    %v861 = vunpack.c.h.b16 %v571
    %v862 = vunpack.c.l.b16 %v572
    %v863 = vunpack.c.h.b16 %v572
    %v864 = vunpack.c.l.b16 %v573
    %v865 = vunpack.c.h.b16 %v573
    %v866 = vunpack.c.l.b16 %v574
    %v867 = vunpack.c.h.b16 %v574
    %v868 = vunpack.c.l.b16 %v575
    %v869 = vunpack.c.h.b16 %v575
    %v870 = vunpack.c.l.b16 %v576
    %v871 = vunpack.c.h.b16 %v576
    %v872 = vunpack.c.l.b16 %v577
    %v873 = vunpack.c.h.b16 %v577
    %v874 = vunpack.c.l.b16 %v578
    %v875 = vunpack.c.h.b16 %v578
    %v876 = vunpack.c.l.b16 %v579
    %v877 = vunpack.c.h.b16 %v579
    %v878 = vunpack.c.l.b16 %v580
    %v879 = vunpack.c.h.b16 %v580
    %v880 = vunpack.c.l.b16 %v581
    %v881 = vunpack.c.h.b16 %v581
    %v882 = vunpack.c.l.b16 %v582
    %v883 = vunpack.c.h.b16 %v582
    %v884 = vunpack.c.l.b16 %v583
    %v885 = vunpack.c.h.b16 %v583
    %v886 = vunpack.c.l.b16 %v584
    %v887 = vunpack.c.h.b16 %v584
    %v888 = vunpack.c.l.b16 %v585
    %v889 = vunpack.c.h.b16 %v585
    %v890 = vunpack.c.l.b16 %v586
    %v891 = vunpack.c.h.b16 %v586
    %v892 = vunpack.c.l.b16 %v587
    %v893 = vunpack.c.h.b16 %v587
    %v894 = vunpack.c.l.b16 %v588
    %v895 = vunpack.c.h.b16 %v588
    %v896 = vunpack.c.l.b16 %v589
    %v897 = vunpack.c.h.b16 %v589
    %v898 = vunpack.c.l.b16 %v590
    %v899 = vunpack.c.h.b16 %v590
    %v900 = vunpack.c.l.b16 %v591
    %v901 = vunpack.c.h.b16 %v591
    %v902 = vunpack.c.l.b16 %v592
    %v903 = vunpack.c.h.b16 %v592
    %v904 = vunpack.c.l.b16 %v593
    %v905 = vunpack.c.h.b16 %v593
    %v906 = vunpack.c.l.b16 %v594
    %v907 = vunpack.c.h.b16 %v594
    %v908 = vunpack.c.l.b16 %v595
    %v909 = vunpack.c.h.b16 %v595
    %v910 = vunpack.c.l.b16 %v596
    %v911 = vunpack.c.h.b16 %v596
    %v912 = vunpack.c.l.b16 %v597
    %v913 = vunpack.c.h.b16 %v597
    %v914 = vunpack.c.l.b16 %v598
    %v915 = vunpack.c.h.b16 %v598
    %v916 = vunpack.c.l.b16 %v599
    %v917 = vunpack.c.h.b16 %v599
    %v918 = vunpack.c.l.b16 %v600
    %v919 = vunpack.c.h.b16 %v600
    %v920 = vunpack.c.l.b16 %v601
    %v921 = vunpack.c.h.b16 %v601
    %v922 = vunpack.c.l.b16 %v602
    %v923 = vunpack.c.h.b16 %v602
    %v924 = vunpack.c.l.b16 %v603
    %v925 = vunpack.c.h.b16 %v603
    %v926 = vunpack.c.l.b16 %v604
    %v927 = vunpack.c.h.b16 %v604
    %v928 = vunpack.c.l.b16 %v605
    %v929 = vunpack.c.h.b16 %v605
    %v930 = vunpack.c.l.b16 %v606
    %v931 = vunpack.c.h.b16 %v606
    %v932 = vunpack.c.l.b16 %v607
    %v933 = vunpack.c.h.b16 %v607
    %v934 = vunpack.c.l.b16 %v608
    %v935 = vunpack.c.h.b16 %v608
    %v936 = vunpack.c.l.b16 %v609
    %v937 = vunpack.c.h.b16 %v609
    %v938 = vunpack.c.l.b16 %v610
    %v939 = vunpack.c.h.b16 %v610
    %v940 = vunpack.c.l.b16 %v611
    %v941 = vunpack.c.h.b16 %v611
    %v942 = vunpack.c.l.b16 %v612
    %v943 = vunpack.c.h.b16 %v612
    %v944 = vunpack.c.l.b16 %v613
    %v945 = vunpack.c.h.b16 %v613
    %v946 = vunpack.c.l.b16 %v614
    %v947 = vunpack.c.h.b16 %v614
    %v948 = vunpack.c.l.b16 %v615
    %v949 = vunpack.c.h.b16 %v615
    %v950 = vunpack.c.l.b16 %v616
    %v951 = vunpack.c.h.b16 %v616
    %v952 = vunpack.c.l.b16 %v617
    %v953 = vunpack.c.h.b16 %v617
    %v954 = vunpack.c.l.b16 %v618
    %v955 = vunpack.c.h.b16 %v618
    %v956 = vunpack.c.l.b16 %v619
    %v957 = vunpack.c.h.b16 %v619
    %v958 = vunpack.c.l.b16 %v620
    %v959 = vunpack.c.h.b16 %v620
    %v960 = vunpack.c.l.b16 %v621
    %v961 = vunpack.c.h.b16 %v621
    %v962 = vunpack.c.l.b16 %v622
    %v963 = vunpack.c.h.b16 %v622
    %v964 = vunpack.c.l.b16 %v623
    %v965 = vunpack.c.h.b16 %v623
    %v966 = vunpack.c.l.b16 %v624
    %v967 = vunpack.c.h.b16 %v624
    %v968 = vunpack.c.l.b16 %v625
    %v969 = vunpack.c.h.b16 %v625
    %v970 = vunpack.c.l.b16 %v626
    %v971 = vunpack.c.h.b16 %v626
    %v972 = vunpack.c.l.b16 %v627
    %v973 = vunpack.c.h.b16 %v627
    %v974 = vunpack.c.l.b16 %v628
    %v975 = vunpack.c.h.b16 %v628
    %v976 = vunpack.c.l.b16 %v629
    %v977 = vunpack.c.h.b16 %v629
    %v978 = vunpack.c.l.b16 %v630
    %v979 = vunpack.c.h.b16 %v630
    %v980 = vunpack.c.l.b16 %v631
    %v981 = vunpack.c.h.b16 %v631
    %v982 = vunpack.c.l.b16 %v632
    %v983 = vunpack.c.h.b16 %v632
    %v984 = vunpack.c.l.b16 %v633
    %v985 = vunpack.c.h.b16 %v633
    %v986 = vunpack.c.l.b16 %v634
    %v987 = vunpack.c.h.b16 %v634
    %v988 = vunpack.c.l.b16 %v635
    %v989 = vunpack.c.h.b16 %v635
    %v990 = vunpack.c.l.b16 %v636
    %v991 = vunpack.c.h.b16 %v636
    %v992 = vunpack.c.l.b16 %v637
    %v993 = vunpack.c.h.b16 %v637
    %v994 = vunpack.c.l.b16 %v638
    %v995 = vunpack.c.h.b16 %v638
    %v996 = vunpack.c.l.b16 %v639
    %v997 = vunpack.c.h.b16 %v639
    %v998 = vunpack.c.l.b16 %v640
    %v999 = vunpack.c.h.b16 %v640
    %v1000 = vunpack.c.l.b16 %v641
    %v1001 = vunpack.c.h.b16 %v641
    %v1002 = vunpack.c.l.b16 %v642
    %v1003 = vunpack.c.h.b16 %v642
    %v1004 = vunpack.c.l.b16 %v643
    %v1005 = vunpack.c.h.b16 %v643
    %v1006 = vunpack.c.l.b16 %v644
    %v1007 = vunpack.c.h.b16 %v644
    %v1008 = vunpack.c.l.b16 %v645
    %v1009 = vunpack.c.h.b16 %v645
    %v1010 = vunpack.c.l.b16 %v646
    %v1011 = vunpack.c.h.b16 %v646
    %v1012 = vunpack.c.l.b16 %v647
    %v1013 = vunpack.c.h.b16 %v647
    %v1014 = vunpack.c.l.b16 %v648
    %v1015 = vunpack.c.h.b16 %v648
    %v1016 = vunpack.c.l.b16 %v649
    %v1017 = vunpack.c.h.b16 %v649
    %v1018 = vunpack.c.l.b16 %v650
    %v1019 = vunpack.c.h.b16 %v650
    %v1020 = vunpack.c.l.b16 %v651
    %v1021 = vunpack.c.h.b16 %v651
    %v1022 = vunpack.c.l.b16 %v652
    %v1023 = vunpack.c.h.b16 %v652
    %v1024 = vunpack.c.l.b16 %v653
    %v1025 = vunpack.c.h.b16 %v653
    %v1026 = vunpack.c.l.b16 %v654
    %v1027 = vunpack.c.h.b16 %v654
    %v1028 = vunpack.c.l.b16 %v655
    %v1029 = vunpack.c.h.b16 %v655
    %v1030 = vunpack.c.l.b16 %v656
    %v1031 = vunpack.c.h.b16 %v656
    %v1032 = vunpack.c.l.b16 %v657
    %v1033 = vunpack.c.h.b16 %v657
    %v1034 = vunpack.c.l.b16 %v658
    %v1035 = vunpack.c.h.b16 %v658
    %v1036 = vunpack.c.l.b16 %v659
    %v1037 = vunpack.c.h.b16 %v659
    %v1038 = vunpack.c.l.b16 %v660
    %v1039 = vunpack.c.h.b16 %v660
    %v1040 = vunpack.c.l.b16 %v661
    %v1041 = vunpack.c.h.b16 %v661
    %v1042 = vunpack.c.l.b16 %v662
    %v1043 = vunpack.c.h.b16 %v662
    %v1044 = vunpack.c.l.b16 %v663
    %v1045 = vunpack.c.h.b16 %v663
    %v1046 = vunpack.c.l.b16 %v664
    %v1047 = vunpack.c.h.b16 %v664
    %v1048 = vunpack.c.l.b16 %v665
    %v1049 = vunpack.c.h.b16 %v665
    %v1050 = vunpack.c.l.b16 %v666
    %v1051 = vunpack.c.h.b16 %v666
    %v1052 = vunpack.c.l.b16 %v667
    %v1053 = vunpack.c.h.b16 %v667
    %v1054 = vunpack.c.l.b16 %v668
    %v1055 = vunpack.c.h.b16 %v668
    %v1056 = vunpack.c.l.b16 %v669
    %v1057 = vunpack.c.h.b16 %v669
    %v1058 = vunpack.c.l.b16 %v670
    %v1059 = vunpack.c.h.b16 %v670
    %v1060 = vunpack.c.l.b16 %v671
    %v1061 = vunpack.c.h.b16 %v671
    %v1062 = vunpack.c.l.b16 %v672
    %v1063 = vunpack.c.h.b16 %v672
    %v1064 = vunpack.c.l.b16 %v673
    %v1065 = vunpack.c.h.b16 %v673
    %v1066 = vunpack.c.l.b16 %v674
    %v1067 = vunpack.c.h.b16 %v674
    %v1068 = vunpack.c.l.b16 %v675
    %v1069 = vunpack.c.h.b16 %v675
    %v1070 = vunpack.c.l.b16 %v676
    %v1071 = vunpack.c.h.b16 %v676
    %v1072 = vunpack.c.l.b16 %v677
    %v1073 = vunpack.c.h.b16 %v677
    %v1074 = vunpack.c.l.b16 %v678
    %v1075 = vunpack.c.h.b16 %v678
    %v1076 = vunpack.c.l.b16 %v679
    %v1077 = vunpack.c.h.b16 %v679
    %v1078 = vunpack.c.l.b16 %v680
    %v1079 = vunpack.c.h.b16 %v680
    %v1080 = vunpack.c.l.b16 %v681
    %v1081 = vunpack.c.h.b16 %v681
    %v1082 = vunpack.c.l.b16 %v682
    %v1083 = vunpack.c.h.b16 %v682
    %v1084 = vunpack.c.l.b16 %v683
    %v1085 = vunpack.c.h.b16 %v683
    %v1086 = vunpack.c.l.b16 %v684
    %v1087 = vunpack.c.h.b16 %v684
    %v1088 = vunpack.c.l.b16 %v685
    %v1089 = vunpack.c.h.b16 %v685
    %v1090 = vunpack.c.l.b16 %v686
    %v1091 = vunpack.c.h.b16 %v686
    %v1092 = vunpack.c.l.b16 %v687
    %v1093 = vunpack.c.h.b16 %v687
    %v1094 = vpack.c.b16 %v842, %v838
    %v1095 = vpack.c.b16 %v843, %v839
    %v1096 = vpack.c.b16 %v844, %v840
    %v1097 = vpack.c.b16 %v845, %v841
    %v1098 = vpack.c.b16 %v850, %v846
    %v1099 = vpack.c.b16 %v851, %v847
    %v1100 = vpack.c.b16 %v852, %v848
    %v1101 = vpack.c.b16 %v853, %v849
    %v1102 = vpack.c.b16 %v858, %v854
    %v1103 = vpack.c.b16 %v859, %v855
    %v1104 = vpack.c.b16 %v860, %v856
    %v1105 = vpack.c.b16 %v861, %v857
    %v1106 = vpack.c.b16 %v866, %v862
    %v1107 = vpack.c.b16 %v867, %v863
    %v1108 = vpack.c.b16 %v868, %v864
    %v1109 = vpack.c.b16 %v869, %v865
    %v1110 = vpack.c.b16 %v874, %v870
    %v1111 = vpack.c.b16 %v875, %v871
    %v1112 = vpack.c.b16 %v876, %v872
    %v1113 = vpack.c.b16 %v877, %v873
    %v1114 = vpack.c.b16 %v882, %v878
    %v1115 = vpack.c.b16 %v883, %v879
    %v1116 = vpack.c.b16 %v884, %v880
    %v1117 = vpack.c.b16 %v885, %v881
    %v1118 = vpack.c.b16 %v890, %v886
    %v1119 = vpack.c.b16 %v891, %v887
    %v1120 = vpack.c.b16 %v892, %v888
    %v1121 = vpack.c.b16 %v893, %v889
    %v1122 = vpack.c.b16 %v898, %v894
    %v1123 = vpack.c.b16 %v899, %v895
    %v1124 = vpack.c.b16 %v900, %v896
    %v1125 = vpack.c.b16 %v901, %v897
    %v1126 = vpack.c.b16 %v906, %v902
    %v1127 = vpack.c.b16 %v907, %v903
    %v1128 = vpack.c.b16 %v908, %v904
    %v1129 = vpack.c.b16 %v909, %v905
    %v1130 = vpack.c.b16 %v914, %v910
    %v1131 = vpack.c.b16 %v915, %v911
    %v1132 = vpack.c.b16 %v916, %v912
    %v1133 = vpack.c.b16 %v917, %v913
    %v1134 = vpack.c.b16 %v922, %v918
    %v1135 = vpack.c.b16 %v923, %v919
    %v1136 = vpack.c.b16 %v924, %v920
    %v1137 = vpack.c.b16 %v925, %v921
    %v1138 = vpack.c.b16 %v930, %v926
    %v1139 = vpack.c.b16 %v931, %v927
    %v1140 = vpack.c.b16 %v932, %v928
    %v1141 = vpack.c.b16 %v933, %v929
    %v1142 = vpack.c.b16 %v938, %v934
    %v1143 = vpack.c.b16 %v939, %v935
    %v1144 = vpack.c.b16 %v940, %v936
    %v1145 = vpack.c.b16 %v941, %v937
    %v1146 = vpack.c.b16 %v946, %v942
    %v1147 = vpack.c.b16 %v947, %v943
    %v1148 = vpack.c.b16 %v948, %v944
    %v1149 = vpack.c.b16 %v949, %v945
    %v1150 = vpack.c.b16 %v954, %v950
    %v1151 = vpack.c.b16 %v955, %v951
    %v1152 = vpack.c.b16 %v956, %v952
    %v1153 = vpack.c.b16 %v957, %v953
    %v1154 = vpack.c.b16 %v962, %v958
    %v1155 = vpack.c.b16 %v963, %v959
    %v1156 = vpack.c.b16 %v964, %v960
    %v1157 = vpack.c.b16 %v965, %v961
    %v1158 = vpack.c.b16 %v970, %v966
    %v1159 = vpack.c.b16 %v971, %v967
    %v1160 = vpack.c.b16 %v972, %v968
    %v1161 = vpack.c.b16 %v973, %v969
    %v1162 = vpack.c.b16 %v978, %v974
    %v1163 = vpack.c.b16 %v979, %v975
    %v1164 = vpack.c.b16 %v980, %v976
    %v1165 = vpack.c.b16 %v981, %v977
    %v1166 = vpack.c.b16 %v986, %v982
    %v1167 = vpack.c.b16 %v987, %v983
    %v1168 = vpack.c.b16 %v988, %v984
    %v1169 = vpack.c.b16 %v989, %v985
    %v1170 = vpack.c.b16 %v994, %v990
    %v1171 = vpack.c.b16 %v995, %v991
    %v1172 = vpack.c.b16 %v996, %v992
    %v1173 = vpack.c.b16 %v997, %v993
    %v1174 = vpack.c.b16 %v1002, %v998
    %v1175 = vpack.c.b16 %v1003, %v999
    %v1176 = vpack.c.b16 %v1004, %v1000
    %v1177 = vpack.c.b16 %v1005, %v1001
    %v1178 = vpack.c.b16 %v1010, %v1006
    %v1179 = vpack.c.b16 %v1011, %v1007
    %v1180 = vpack.c.b16 %v1012, %v1008
    %v1181 = vpack.c.b16 %v1013, %v1009
    %v1182 = vpack.c.b16 %v1018, %v1014
    %v1183 = vpack.c.b16 %v1019, %v1015
    %v1184 = vpack.c.b16 %v1020, %v1016
    %v1185 = vpack.c.b16 %v1021, %v1017
    %v1186 = vpack.c.b16 %v1026, %v1022
    %v1187 = vpack.c.b16 %v1027, %v1023
    %v1188 = vpack.c.b16 %v1028, %v1024
    %v1189 = vpack.c.b16 %v1029, %v1025
    %v1190 = vpack.c.b16 %v1034, %v1030
    %v1191 = vpack.c.b16 %v1035, %v1031
    %v1192 = vpack.c.b16 %v1036, %v1032
    %v1193 = vpack.c.b16 %v1037, %v1033
    %v1194 = vpack.c.b16 %v1042, %v1038
    %v1195 = vpack.c.b16 %v1043, %v1039
    %v1196 = vpack.c.b16 %v1044, %v1040
    %v1197 = vpack.c.b16 %v1045, %v1041
    %v1198 = vpack.c.b16 %v1050, %v1046
    %v1199 = vpack.c.b16 %v1051, %v1047
    %v1200 = vpack.c.b16 %v1052, %v1048
    %v1201 = vpack.c.b16 %v1053, %v1049
    %v1202 = vpack.c.b16 %v1058, %v1054
    %v1203 = vpack.c.b16 %v1059, %v1055
    %v1204 = vpack.c.b16 %v1060, %v1056
    %v1205 = vpack.c.b16 %v1061, %v1057
    %v1206 = vpack.c.b16 %v1066, %v1062
    %v1207 = vpack.c.b16 %v1067, %v1063
    %v1208 = vpack.c.b16 %v1068, %v1064
    %v1209 = vpack.c.b16 %v1069, %v1065
    %v1210 = vpack.c.b16 %v1074, %v1070
    %v1211 = vpack.c.b16 %v1075, %v1071
    %v1212 = vpack.c.b16 %v1076, %v1072
    %v1213 = vpack.c.b16 %v1077, %v1073
    %v1214 = vpack.c.b16 %v1082, %v1078
    %v1215 = vpack.c.b16 %v1083, %v1079
    %v1216 = vpack.c.b16 %v1084, %v1080
    %v1217 = vpack.c.b16 %v1085, %v1081
    %v1218 = vpack.c.b16 %v1090, %v1086
    %v1219 = vpack.c.b16 %v1091, %v1087
    %v1220 = vpack.c.b16 %v1092, %v1088
    %v1221 = vpack.c.b16 %v1093, %v1089
    %1350 = vmatprep.subr.bf16.mxu0 %v1123
    %1351 = vmatpush1.bf16.msra.mxu0 %v1122
    %1352 = vmatprep.subr.bf16.mxu0 %v1119
    %1353 = vmatpush1.bf16.msra.mxu0 %v1118
    %1354 = vmatprep.subr.bf16.mxu0 %v1115
    %1355 = vmatpush1.bf16.msra.mxu0 %v1114
    %1356 = vmatprep.subr.bf16.mxu0 %v1111
    %1357 = vmatpush1.bf16.msra.mxu0 %v1110
    %1358 = vmatprep.subr.bf16.mxu0 %v1107
    %1359 = vmatpush1.bf16.msra.mxu0 %v1106
    %1360 = vmatprep.subr.bf16.mxu0 %v1103
    %1361 = vmatpush1.bf16.msra.mxu0 %v1102
    %1362 = vmatprep.subr.bf16.mxu0 %v1099
    %1363 = vmatpush1.bf16.msra.mxu0 %v1098
    %1364 = vmatprep.subr.bf16.mxu0 %v1095
    %1365 = vmatpush1.bf16.msra.mxu0 %v1094
    %1366 = vmatprep.subr.bf16.mxu0 %v1155
    %1367 = vmatpush2.bf16.msra.mxu0 %v1154
    %1368 = vmatprep.subr.bf16.mxu0 %v1151
    %1369 = vmatpush2.bf16.msra.mxu0 %v1150
    %1370 = vmatprep.subr.bf16.mxu0 %v1147
    %1371 = vmatpush2.bf16.msra.mxu0 %v1146
    %1372 = vmatprep.subr.bf16.mxu0 %v1143
    %1373 = vmatpush2.bf16.msra.mxu0 %v1142
    %1374 = vmatprep.subr.bf16.mxu0 %v1139
    %1375 = vmatpush2.bf16.msra.mxu0 %v1138
    %1376 = vmatprep.subr.bf16.mxu0 %v1135
    %1377 = vmatpush2.bf16.msra.mxu0 %v1134
    %1378 = vmatprep.subr.bf16.mxu0 %v1131
    %1379 = vmatpush2.bf16.msra.mxu0 %v1130
    %1380 = vmatprep.subr.bf16.mxu0 %v1127
    %1381 = vmatpush2.bf16.msra.mxu0 %v1126
    %1382 = vmatprep.mubr.bf16.mxu0 %v557
    %1383 = vmatmul.mubr.bf16.gmra.mxu0 %v556
    %v1384 = vpop.f32.mrf.mxu0
    %v1385 = vadd.f32 %v693, %v1384
    %v1386 = vpop.f32.mrf.mxu0
    %v1387 = vadd.f32 %v697, %v1386
    %v1388 = vpop.f32.mrf.mxu0
    %v1389 = vpop.f32.mrf.mxu0
    %1390 = vdwg.mxu0
    %1391 = vmatprep.subr.bf16.mxu0 %v1187
    %1392 = vmatpush1.bf16.msra.mxu0 %v1186
    %1393 = vmatprep.subr.bf16.mxu0 %v1183
    %1394 = vmatpush1.bf16.msra.mxu0 %v1182
    %1395 = vmatprep.subr.bf16.mxu0 %v1179
    %1396 = vmatpush1.bf16.msra.mxu0 %v1178
    %1397 = vmatprep.subr.bf16.mxu0 %v1175
    %1398 = vmatpush1.bf16.msra.mxu0 %v1174
    %1399 = vmatprep.subr.bf16.mxu0 %v1171
    %1400 = vmatpush1.bf16.msra.mxu0 %v1170
    %1401 = vmatprep.subr.bf16.mxu0 %v1167
    %1402 = vmatpush1.bf16.msra.mxu0 %v1166
    %1403 = vmatprep.subr.bf16.mxu0 %v1163
    %1404 = vmatpush1.bf16.msra.mxu0 %v1162
    %1405 = vmatprep.subr.bf16.mxu0 %v1159
    %1406 = vmatpush1.bf16.msra.mxu0 %v1158
    %1407 = vmatprep.subr.bf16.mxu0 %v1219
    %1408 = vmatpush2.bf16.msra.mxu0 %v1218
    %1409 = vmatprep.subr.bf16.mxu0 %v1215
    %1410 = vmatpush2.bf16.msra.mxu0 %v1214
    %1411 = vmatprep.subr.bf16.mxu0 %v1211
    %1412 = vmatpush2.bf16.msra.mxu0 %v1210
    %1413 = vmatprep.subr.bf16.mxu0 %v1207
    %1414 = vmatpush2.bf16.msra.mxu0 %v1206
    %1415 = vmatprep.subr.bf16.mxu0 %v1203
    %1416 = vmatpush2.bf16.msra.mxu0 %v1202
    %1417 = vmatprep.subr.bf16.mxu0 %v1199
    %1418 = vmatpush2.bf16.msra.mxu0 %v1198
    %1419 = vmatprep.subr.bf16.mxu0 %v1195
    %1420 = vmatpush2.bf16.msra.mxu0 %v1194
    %1421 = vmatprep.subr.bf16.mxu0 %v1191
    %1422 = vmatpush2.bf16.msra.mxu0 %v1190
    %1423 = vmatprep.mubr.bf16.mxu0 %v559
    %1424 = vmatmul.mubr.bf16.gmra.mxu0 %v558
    %v1425 = vpop.f32.mrf.mxu0
    %v1426 = vadd.f32 %v1385, %v1425
    %v1427 = vpop.f32.mrf.mxu0
    %v1428 = vadd.f32 %v1387, %v1427
    %v1429 = vpop.f32.mrf.mxu0
    %v1430 = vpop.f32.mrf.mxu0
    %1431 = vdwg.mxu0
    %1432 = vmatprep.subr.bf16.mxu0 %v1125
    %1433 = vmatpush1.bf16.msra.mxu0 %v1124
    %1434 = vmatprep.subr.bf16.mxu0 %v1121
    %1435 = vmatpush1.bf16.msra.mxu0 %v1120
    %1436 = vmatprep.subr.bf16.mxu0 %v1117
    %1437 = vmatpush1.bf16.msra.mxu0 %v1116
    %1438 = vmatprep.subr.bf16.mxu0 %v1113
    %1439 = vmatpush1.bf16.msra.mxu0 %v1112
    %1440 = vmatprep.subr.bf16.mxu0 %v1109
    %1441 = vmatpush1.bf16.msra.mxu0 %v1108
    %1442 = vmatprep.subr.bf16.mxu0 %v1105
    %1443 = vmatpush1.bf16.msra.mxu0 %v1104
    %1444 = vmatprep.subr.bf16.mxu0 %v1101
    %1445 = vmatpush1.bf16.msra.mxu0 %v1100
    %1446 = vmatprep.subr.bf16.mxu0 %v1097
    %1447 = vmatpush1.bf16.msra.mxu0 %v1096
    %1448 = vmatprep.subr.bf16.mxu0 %v1157
    %1449 = vmatpush2.bf16.msra.mxu0 %v1156
    %1450 = vmatprep.subr.bf16.mxu0 %v1153
    %1451 = vmatpush2.bf16.msra.mxu0 %v1152
    %1452 = vmatprep.subr.bf16.mxu0 %v1149
    %1453 = vmatpush2.bf16.msra.mxu0 %v1148
    %1454 = vmatprep.subr.bf16.mxu0 %v1145
    %1455 = vmatpush2.bf16.msra.mxu0 %v1144
    %1456 = vmatprep.subr.bf16.mxu0 %v1141
    %1457 = vmatpush2.bf16.msra.mxu0 %v1140
    %1458 = vmatprep.subr.bf16.mxu0 %v1137
    %1459 = vmatpush2.bf16.msra.mxu0 %v1136
    %1460 = vmatprep.subr.bf16.mxu0 %v1133
    %1461 = vmatpush2.bf16.msra.mxu0 %v1132
    %1462 = vmatprep.subr.bf16.mxu0 %v1129
    %1463 = vmatpush2.bf16.msra.mxu0 %v1128
    %1464 = vmatprep.mubr.bf16.mxu0 %v557
    %1465 = vmatmul.mubr.bf16.gmra.mxu0 %v556
    %v1466 = vpop.f32.mrf.mxu0
    %v1467 = vadd.f32 %v701, %v1466
    %v1468 = vpop.f32.mrf.mxu0
    %v1469 = vadd.f32 %v705, %v1468
    %v1470 = vpop.f32.mrf.mxu0
    %v1471 = vpop.f32.mrf.mxu0
    %1472 = vdwg.mxu0
    %1473 = vmatprep.subr.bf16.mxu0 %v1189
    %1474 = vmatpush1.bf16.msra.mxu0 %v1188
    %1475 = vmatprep.subr.bf16.mxu0 %v1185
    %1476 = vmatpush1.bf16.msra.mxu0 %v1184
    %1477 = vmatprep.subr.bf16.mxu0 %v1181
    %1478 = vmatpush1.bf16.msra.mxu0 %v1180
    %1479 = vmatprep.subr.bf16.mxu0 %v1177
    %1480 = vmatpush1.bf16.msra.mxu0 %v1176
    %1481 = vmatprep.subr.bf16.mxu0 %v1173
    %1482 = vmatpush1.bf16.msra.mxu0 %v1172
    %1483 = vmatprep.subr.bf16.mxu0 %v1169
    %1484 = vmatpush1.bf16.msra.mxu0 %v1168
    %1485 = vmatprep.subr.bf16.mxu0 %v1165
    %1486 = vmatpush1.bf16.msra.mxu0 %v1164
    %1487 = vmatprep.subr.bf16.mxu0 %v1161
    %1488 = vmatpush1.bf16.msra.mxu0 %v1160
    %1489 = vmatprep.subr.bf16.mxu0 %v1221
    %1490 = vmatpush2.bf16.msra.mxu0 %v1220
    %1491 = vmatprep.subr.bf16.mxu0 %v1217
    %1492 = vmatpush2.bf16.msra.mxu0 %v1216
    %1493 = vmatprep.subr.bf16.mxu0 %v1213
    %1494 = vmatpush2.bf16.msra.mxu0 %v1212
    %1495 = vmatprep.subr.bf16.mxu0 %v1209
    %1496 = vmatpush2.bf16.msra.mxu0 %v1208
    %1497 = vmatprep.subr.bf16.mxu0 %v1205
    %1498 = vmatpush2.bf16.msra.mxu0 %v1204
    %1499 = vmatprep.subr.bf16.mxu0 %v1201
    %1500 = vmatpush2.bf16.msra.mxu0 %v1200
    %1501 = vmatprep.subr.bf16.mxu0 %v1197
    %1502 = vmatpush2.bf16.msra.mxu0 %v1196
    %1503 = vmatprep.subr.bf16.mxu0 %v1193
    %1504 = vmatpush2.bf16.msra.mxu0 %v1192
    %1505 = vmatprep.mubr.bf16.mxu0 %v559
    %1506 = vmatmul.mubr.bf16.gmra.mxu0 %v558
    %v1507 = vpop.f32.mrf.mxu0
    %v1508 = vadd.f32 %v1467, %v1507
    %v1509 = vpop.f32.mrf.mxu0
    %v1510 = vadd.f32 %v1469, %v1509
    %v1511 = vpop.f32.mrf.mxu0
    %v1512 = vpop.f32.mrf.mxu0
    %1513 = vdwg.mxu0
    %v1514 = vmul.f32 %v1426, 0.2
    %v1515 = vmul.f32 %v1428, 0.2
    %v1516 = vmul.f32 %v1508, 0.2
    %v1517 = vmul.f32 %v1510, 0.2
    %v1518 = vmax.f32 %v1426, %v1514
    %v1519 = vmax.f32 %v1428, %v1515
    %v1520 = vmax.f32 %v1508, %v1516
    %v1521 = vmax.f32 %v1510, %v1517
    %v1522 = vpack.c.bf16 %v1518, %v1518
    %v1523 = vpack.c.bf16 %v1519, %v1519
    %v1524 = vpack.c.bf16 %v1520, %v1520
    %v1525 = vpack.c.bf16 %v1521, %v1521
    %v1526 = vld [vmem:[#allocation6] sm:$0xff]
    %v1527 = vld [vmem:[#allocation6 + $0x8] sm:$0xff]
    %v1528 = vld [vmem:[#allocation6 + $0x10] sm:$0xff]
    %v1529 = vld [vmem:[#allocation6 + $0x18] sm:$0xff]
    %v1530 = vld [vmem:[#allocation6 + $0x20] sm:$0xff]
    %v1531 = vld [vmem:[#allocation6 + $0x28] sm:$0xff]
    %v1532 = vld [vmem:[#allocation6 + $0x30] sm:$0xff]
    %v1533 = vld [vmem:[#allocation6 + $0x38] sm:$0xff]
    %v1534 = vld [vmem:[#allocation6 + $0x40] sm:$0xff]
    %v1535 = vld [vmem:[#allocation6 + $0x48] sm:$0xff]
    %v1536 = vld [vmem:[#allocation6 + $0x50] sm:$0xff]
    %v1537 = vld [vmem:[#allocation6 + $0x58] sm:$0xff]
    %v1538 = vld [vmem:[#allocation6 + $0x60] sm:$0xff]
    %v1539 = vld [vmem:[#allocation6 + $0x68] sm:$0xff]
    %v1540 = vld [vmem:[#allocation6 + $0x70] sm:$0xff]
    %v1541 = vld [vmem:[#allocation6 + $0x78] sm:$0xff]
    %v1542 = vld [vmem:[#allocation6 + $0x80] sm:$0xff]
    %v1543 = vld [vmem:[#allocation6 + $0x88] sm:$0xff]
    %v1544 = vld [vmem:[#allocation6 + $0x90] sm:$0xff]
    %v1545 = vld [vmem:[#allocation6 + $0x98] sm:$0xff]
    %v1546 = vld [vmem:[#allocation6 + $0xa0] sm:$0xff]
    %v1547 = vld [vmem:[#allocation6 + $0xa8] sm:$0xff]
    %v1548 = vld [vmem:[#allocation6 + $0xb0] sm:$0xff]
    %v1549 = vld [vmem:[#allocation6 + $0xb8] sm:$0xff]
    %v1550 = vld [vmem:[#allocation6 + $0xc0] sm:$0xff]
    %v1551 = vld [vmem:[#allocation6 + $0xc8] sm:$0xff]
    %v1552 = vld [vmem:[#allocation6 + $0xd0] sm:$0xff]
    %v1553 = vld [vmem:[#allocation6 + $0xd8] sm:$0xff]
    %v1554 = vld [vmem:[#allocation6 + $0xe0] sm:$0xff]
    %v1555 = vld [vmem:[#allocation6 + $0xe8] sm:$0xff]
    %v1556 = vld [vmem:[#allocation6 + $0xf0] sm:$0xff]
    %v1557 = vld [vmem:[#allocation6 + $0xf8] sm:$0xff]
    %v1558 = vld [vmem:[#allocation6 + $0x100] sm:$0xff]
    %v1559 = vld [vmem:[#allocation6 + $0x108] sm:$0xff]
    %v1560 = vld [vmem:[#allocation6 + $0x110] sm:$0xff]
    %v1561 = vld [vmem:[#allocation6 + $0x118] sm:$0xff]
    %v1562 = vld [vmem:[#allocation6 + $0x120] sm:$0xff]
    %v1563 = vld [vmem:[#allocation6 + $0x128] sm:$0xff]
    %v1564 = vld [vmem:[#allocation6 + $0x130] sm:$0xff]
    %v1565 = vld [vmem:[#allocation6 + $0x138] sm:$0xff]
    %v1566 = vld [vmem:[#allocation6 + $0x140] sm:$0xff]
    %v1567 = vld [vmem:[#allocation6 + $0x148] sm:$0xff]
    %v1568 = vld [vmem:[#allocation6 + $0x150] sm:$0xff]
    %v1569 = vld [vmem:[#allocation6 + $0x158] sm:$0xff]
    %v1570 = vld [vmem:[#allocation6 + $0x160] sm:$0xff]
    %v1571 = vld [vmem:[#allocation6 + $0x168] sm:$0xff]
    %v1572 = vld [vmem:[#allocation6 + $0x170] sm:$0xff]
    %v1573 = vld [vmem:[#allocation6 + $0x178] sm:$0xff]
    %v1574 = vld [vmem:[#allocation6 + $0x180] sm:$0xff]
    %v1575 = vld [vmem:[#allocation6 + $0x188] sm:$0xff]
    %v1576 = vld [vmem:[#allocation6 + $0x190] sm:$0xff]
    %v1577 = vld [vmem:[#allocation6 + $0x198] sm:$0xff]
    %v1578 = vld [vmem:[#allocation6 + $0x1a0] sm:$0xff]
    %v1579 = vld [vmem:[#allocation6 + $0x1a8] sm:$0xff]
    %v1580 = vld [vmem:[#allocation6 + $0x1b0] sm:$0xff]
    %v1581 = vld [vmem:[#allocation6 + $0x1b8] sm:$0xff]
    %v1582 = vld [vmem:[#allocation6 + $0x1c0] sm:$0xff]
    %v1583 = vld [vmem:[#allocation6 + $0x1c8] sm:$0xff]
    %v1584 = vld [vmem:[#allocation6 + $0x1d0] sm:$0xff]
    %v1585 = vld [vmem:[#allocation6 + $0x1d8] sm:$0xff]
    %v1586 = vld [vmem:[#allocation6 + $0x1e0] sm:$0xff]
    %v1587 = vld [vmem:[#allocation6 + $0x1e8] sm:$0xff]
    %v1588 = vld [vmem:[#allocation6 + $0x1f0] sm:$0xff]
    %v1589 = vld [vmem:[#allocation6 + $0x1f8] sm:$0xff]
    %v1590 = vld [vmem:[#allocation6 + $0x200] sm:$0xff]
    %v1591 = vld [vmem:[#allocation6 + $0x208] sm:$0xff]
    %v1592 = vld [vmem:[#allocation6 + $0x210] sm:$0xff]
    %v1593 = vld [vmem:[#allocation6 + $0x218] sm:$0xff]
    %v1594 = vld [vmem:[#allocation6 + $0x220] sm:$0xff]
    %v1595 = vld [vmem:[#allocation6 + $0x228] sm:$0xff]
    %v1596 = vld [vmem:[#allocation6 + $0x230] sm:$0xff]
    %v1597 = vld [vmem:[#allocation6 + $0x238] sm:$0xff]
    %v1598 = vld [vmem:[#allocation6 + $0x240] sm:$0xff]
    %v1599 = vld [vmem:[#allocation6 + $0x248] sm:$0xff]
    %v1600 = vld [vmem:[#allocation6 + $0x250] sm:$0xff]
    %v1601 = vld [vmem:[#allocation6 + $0x258] sm:$0xff]
    %v1602 = vld [vmem:[#allocation6 + $0x260] sm:$0xff]
    %v1603 = vld [vmem:[#allocation6 + $0x268] sm:$0xff]
    %v1604 = vld [vmem:[#allocation6 + $0x270] sm:$0xff]
    %v1605 = vld [vmem:[#allocation6 + $0x278] sm:$0xff]
    %v1606 = vld [vmem:[#allocation6 + $0x280] sm:$0xff]
    %v1607 = vld [vmem:[#allocation6 + $0x288] sm:$0xff]
    %v1608 = vld [vmem:[#allocation6 + $0x290] sm:$0xff]
    %v1609 = vld [vmem:[#allocation6 + $0x298] sm:$0xff]
    %v1610 = vld [vmem:[#allocation6 + $0x2a0] sm:$0xff]
    %v1611 = vld [vmem:[#allocation6 + $0x2a8] sm:$0xff]
    %v1612 = vld [vmem:[#allocation6 + $0x2b0] sm:$0xff]
    %v1613 = vld [vmem:[#allocation6 + $0x2b8] sm:$0xff]
    %v1614 = vld [vmem:[#allocation6 + $0x2c0] sm:$0xff]
    %v1615 = vld [vmem:[#allocation6 + $0x2c8] sm:$0xff]
    %v1616 = vld [vmem:[#allocation6 + $0x2d0] sm:$0xff]
    %v1617 = vld [vmem:[#allocation6 + $0x2d8] sm:$0xff]
    %v1618 = vld [vmem:[#allocation6 + $0x2e0] sm:$0xff]
    %v1619 = vld [vmem:[#allocation6 + $0x2e8] sm:$0xff]
    %v1620 = vld [vmem:[#allocation6 + $0x2f0] sm:$0xff]
    %v1621 = vld [vmem:[#allocation6 + $0x2f8] sm:$0xff]
    %v1622 = vld [vmem:[#allocation6 + $0x300] sm:$0xff]
    %v1623 = vld [vmem:[#allocation6 + $0x308] sm:$0xff]
    %v1624 = vld [vmem:[#allocation6 + $0x310] sm:$0xff]
    %v1625 = vld [vmem:[#allocation6 + $0x318] sm:$0xff]
    %v1626 = vld [vmem:[#allocation6 + $0x320] sm:$0xff]
    %v1627 = vld [vmem:[#allocation6 + $0x328] sm:$0xff]
    %v1628 = vld [vmem:[#allocation6 + $0x330] sm:$0xff]
    %v1629 = vld [vmem:[#allocation6 + $0x338] sm:$0xff]
    %v1630 = vld [vmem:[#allocation6 + $0x340] sm:$0xff]
    %v1631 = vld [vmem:[#allocation6 + $0x348] sm:$0xff]
    %v1632 = vld [vmem:[#allocation6 + $0x350] sm:$0xff]
    %v1633 = vld [vmem:[#allocation6 + $0x358] sm:$0xff]
    %v1634 = vld [vmem:[#allocation6 + $0x360] sm:$0xff]
    %v1635 = vld [vmem:[#allocation6 + $0x368] sm:$0xff]
    %v1636 = vld [vmem:[#allocation6 + $0x370] sm:$0xff]
    %v1637 = vld [vmem:[#allocation6 + $0x378] sm:$0xff]
    %v1638 = vld [vmem:[#allocation6 + $0x380] sm:$0xff]
    %v1639 = vld [vmem:[#allocation6 + $0x388] sm:$0xff]
    %v1640 = vld [vmem:[#allocation6 + $0x390] sm:$0xff]
    %v1641 = vld [vmem:[#allocation6 + $0x398] sm:$0xff]
    %v1642 = vld [vmem:[#allocation6 + $0x3a0] sm:$0xff]
    %v1643 = vld [vmem:[#allocation6 + $0x3a8] sm:$0xff]
    %v1644 = vld [vmem:[#allocation6 + $0x3b0] sm:$0xff]
    %v1645 = vld [vmem:[#allocation6 + $0x3b8] sm:$0xff]
    %v1646 = vld [vmem:[#allocation6 + $0x3c0] sm:$0xff]
    %v1647 = vld [vmem:[#allocation6 + $0x3c8] sm:$0xff]
    %v1648 = vld [vmem:[#allocation6 + $0x3d0] sm:$0xff]
    %v1649 = vld [vmem:[#allocation6 + $0x3d8] sm:$0xff]
    %v1650 = vld [vmem:[#allocation6 + $0x3e0] sm:$0xff]
    %v1651 = vld [vmem:[#allocation6 + $0x3e8] sm:$0xff]
    %v1652 = vld [vmem:[#allocation6 + $0x3f0] sm:$0xff]
    %v1653 = vld [vmem:[#allocation6 + $0x3f8] sm:$0xff]
    %v1654 = vld [vmem:[%s6] sm:$0xf]
    %v1656 = vlaneseq
    %v1657 = vshrl.u32 %v1656, 7
    %v1658 = vsub.s32 0, %v1657
    %v1659 = vrot.slane %v1654, %v1658
    %v1660 = vlaneseq
    %v1661 = vshrl.u32 %v1660, 7
    %v1662 = vsub.s32 1, %v1661
    %v1663 = vrot.slane %v1654, %v1662
    %v1664 = vlaneseq
    %v1665 = vshrl.u32 %v1664, 7
    %v1666 = vsub.s32 2, %v1665
    %v1667 = vrot.slane %v1654, %v1666
    %v1668 = vlaneseq
    %v1669 = vshrl.u32 %v1668, 7
    %v1670 = vsub.s32 3, %v1669
    %v1671 = vrot.slane %v1654, %v1670
    %v1804 = vunpack.c.l.b16 %v1526
    %v1805 = vunpack.c.h.b16 %v1526
    %v1806 = vunpack.c.l.b16 %v1527
    %v1807 = vunpack.c.h.b16 %v1527
    %v1808 = vunpack.c.l.b16 %v1528
    %v1809 = vunpack.c.h.b16 %v1528
    %v1810 = vunpack.c.l.b16 %v1529
    %v1811 = vunpack.c.h.b16 %v1529
    %v1812 = vunpack.c.l.b16 %v1530
    %v1813 = vunpack.c.h.b16 %v1530
    %v1814 = vunpack.c.l.b16 %v1531
    %v1815 = vunpack.c.h.b16 %v1531
    %v1816 = vunpack.c.l.b16 %v1532
    %v1817 = vunpack.c.h.b16 %v1532
    %v1818 = vunpack.c.l.b16 %v1533
    %v1819 = vunpack.c.h.b16 %v1533
    %v1820 = vunpack.c.l.b16 %v1534
    %v1821 = vunpack.c.h.b16 %v1534
    %v1822 = vunpack.c.l.b16 %v1535
    %v1823 = vunpack.c.h.b16 %v1535
    %v1824 = vunpack.c.l.b16 %v1536
    %v1825 = vunpack.c.h.b16 %v1536
    %v1826 = vunpack.c.l.b16 %v1537
    %v1827 = vunpack.c.h.b16 %v1537
    %v1828 = vunpack.c.l.b16 %v1538
    %v1829 = vunpack.c.h.b16 %v1538
    %v1830 = vunpack.c.l.b16 %v1539
    %v1831 = vunpack.c.h.b16 %v1539
    %v1832 = vunpack.c.l.b16 %v1540
    %v1833 = vunpack.c.h.b16 %v1540
    %v1834 = vunpack.c.l.b16 %v1541
    %v1835 = vunpack.c.h.b16 %v1541
    %v1836 = vunpack.c.l.b16 %v1542
    %v1837 = vunpack.c.h.b16 %v1542
    %v1838 = vunpack.c.l.b16 %v1543
    %v1839 = vunpack.c.h.b16 %v1543
    %v1840 = vunpack.c.l.b16 %v1544
    %v1841 = vunpack.c.h.b16 %v1544
    %v1842 = vunpack.c.l.b16 %v1545
    %v1843 = vunpack.c.h.b16 %v1545
    %v1844 = vunpack.c.l.b16 %v1546
    %v1845 = vunpack.c.h.b16 %v1546
    %v1846 = vunpack.c.l.b16 %v1547
    %v1847 = vunpack.c.h.b16 %v1547
    %v1848 = vunpack.c.l.b16 %v1548
    %v1849 = vunpack.c.h.b16 %v1548
    %v1850 = vunpack.c.l.b16 %v1549
    %v1851 = vunpack.c.h.b16 %v1549
    %v1852 = vunpack.c.l.b16 %v1550
    %v1853 = vunpack.c.h.b16 %v1550
    %v1854 = vunpack.c.l.b16 %v1551
    %v1855 = vunpack.c.h.b16 %v1551
    %v1856 = vunpack.c.l.b16 %v1552
    %v1857 = vunpack.c.h.b16 %v1552
    %v1858 = vunpack.c.l.b16 %v1553
    %v1859 = vunpack.c.h.b16 %v1553
    %v1860 = vunpack.c.l.b16 %v1554
    %v1861 = vunpack.c.h.b16 %v1554
    %v1862 = vunpack.c.l.b16 %v1555
    %v1863 = vunpack.c.h.b16 %v1555
    %v1864 = vunpack.c.l.b16 %v1556
    %v1865 = vunpack.c.h.b16 %v1556
    %v1866 = vunpack.c.l.b16 %v1557
    %v1867 = vunpack.c.h.b16 %v1557
    %v1868 = vunpack.c.l.b16 %v1558
    %v1869 = vunpack.c.h.b16 %v1558
    %v1870 = vunpack.c.l.b16 %v1559
    %v1871 = vunpack.c.h.b16 %v1559
    %v1872 = vunpack.c.l.b16 %v1560
    %v1873 = vunpack.c.h.b16 %v1560
    %v1874 = vunpack.c.l.b16 %v1561
    %v1875 = vunpack.c.h.b16 %v1561
    %v1876 = vunpack.c.l.b16 %v1562
    %v1877 = vunpack.c.h.b16 %v1562
    %v1878 = vunpack.c.l.b16 %v1563
    %v1879 = vunpack.c.h.b16 %v1563
    %v1880 = vunpack.c.l.b16 %v1564
    %v1881 = vunpack.c.h.b16 %v1564
    %v1882 = vunpack.c.l.b16 %v1565
    %v1883 = vunpack.c.h.b16 %v1565
    %v1884 = vunpack.c.l.b16 %v1566
    %v1885 = vunpack.c.h.b16 %v1566
    %v1886 = vunpack.c.l.b16 %v1567
    %v1887 = vunpack.c.h.b16 %v1567
    %v1888 = vunpack.c.l.b16 %v1568
    %v1889 = vunpack.c.h.b16 %v1568
    %v1890 = vunpack.c.l.b16 %v1569
    %v1891 = vunpack.c.h.b16 %v1569
    %v1892 = vunpack.c.l.b16 %v1570
    %v1893 = vunpack.c.h.b16 %v1570
    %v1894 = vunpack.c.l.b16 %v1571
    %v1895 = vunpack.c.h.b16 %v1571
    %v1896 = vunpack.c.l.b16 %v1572
    %v1897 = vunpack.c.h.b16 %v1572
    %v1898 = vunpack.c.l.b16 %v1573
    %v1899 = vunpack.c.h.b16 %v1573
    %v1900 = vunpack.c.l.b16 %v1574
    %v1901 = vunpack.c.h.b16 %v1574
    %v1902 = vunpack.c.l.b16 %v1575
    %v1903 = vunpack.c.h.b16 %v1575
    %v1904 = vunpack.c.l.b16 %v1576
    %v1905 = vunpack.c.h.b16 %v1576
    %v1906 = vunpack.c.l.b16 %v1577
    %v1907 = vunpack.c.h.b16 %v1577
    %v1908 = vunpack.c.l.b16 %v1578
    %v1909 = vunpack.c.h.b16 %v1578
    %v1910 = vunpack.c.l.b16 %v1579
    %v1911 = vunpack.c.h.b16 %v1579
    %v1912 = vunpack.c.l.b16 %v1580
    %v1913 = vunpack.c.h.b16 %v1580
    %v1914 = vunpack.c.l.b16 %v1581
    %v1915 = vunpack.c.h.b16 %v1581
    %v1916 = vunpack.c.l.b16 %v1582
    %v1917 = vunpack.c.h.b16 %v1582
    %v1918 = vunpack.c.l.b16 %v1583
    %v1919 = vunpack.c.h.b16 %v1583
    %v1920 = vunpack.c.l.b16 %v1584
    %v1921 = vunpack.c.h.b16 %v1584
    %v1922 = vunpack.c.l.b16 %v1585
    %v1923 = vunpack.c.h.b16 %v1585
    %v1924 = vunpack.c.l.b16 %v1586
    %v1925 = vunpack.c.h.b16 %v1586
    %v1926 = vunpack.c.l.b16 %v1587
    %v1927 = vunpack.c.h.b16 %v1587
    %v1928 = vunpack.c.l.b16 %v1588
    %v1929 = vunpack.c.h.b16 %v1588
    %v1930 = vunpack.c.l.b16 %v1589
    %v1931 = vunpack.c.h.b16 %v1589
    %v1932 = vunpack.c.l.b16 %v1590
    %v1933 = vunpack.c.h.b16 %v1590
    %v1934 = vunpack.c.l.b16 %v1591
    %v1935 = vunpack.c.h.b16 %v1591
    %v1936 = vunpack.c.l.b16 %v1592
    %v1937 = vunpack.c.h.b16 %v1592
    %v1938 = vunpack.c.l.b16 %v1593
    %v1939 = vunpack.c.h.b16 %v1593
    %v1940 = vunpack.c.l.b16 %v1594
    %v1941 = vunpack.c.h.b16 %v1594
    %v1942 = vunpack.c.l.b16 %v1595
    %v1943 = vunpack.c.h.b16 %v1595
    %v1944 = vunpack.c.l.b16 %v1596
    %v1945 = vunpack.c.h.b16 %v1596
    %v1946 = vunpack.c.l.b16 %v1597
    %v1947 = vunpack.c.h.b16 %v1597
    %v1948 = vunpack.c.l.b16 %v1598
    %v1949 = vunpack.c.h.b16 %v1598
    %v1950 = vunpack.c.l.b16 %v1599
    %v1951 = vunpack.c.h.b16 %v1599
    %v1952 = vunpack.c.l.b16 %v1600
    %v1953 = vunpack.c.h.b16 %v1600
    %v1954 = vunpack.c.l.b16 %v1601
    %v1955 = vunpack.c.h.b16 %v1601
    %v1956 = vunpack.c.l.b16 %v1602
    %v1957 = vunpack.c.h.b16 %v1602
    %v1958 = vunpack.c.l.b16 %v1603
    %v1959 = vunpack.c.h.b16 %v1603
    %v1960 = vunpack.c.l.b16 %v1604
    %v1961 = vunpack.c.h.b16 %v1604
    %v1962 = vunpack.c.l.b16 %v1605
    %v1963 = vunpack.c.h.b16 %v1605
    %v1964 = vunpack.c.l.b16 %v1606
    %v1965 = vunpack.c.h.b16 %v1606
    %v1966 = vunpack.c.l.b16 %v1607
    %v1967 = vunpack.c.h.b16 %v1607
    %v1968 = vunpack.c.l.b16 %v1608
    %v1969 = vunpack.c.h.b16 %v1608
    %v1970 = vunpack.c.l.b16 %v1609
    %v1971 = vunpack.c.h.b16 %v1609
    %v1972 = vunpack.c.l.b16 %v1610
    %v1973 = vunpack.c.h.b16 %v1610
    %v1974 = vunpack.c.l.b16 %v1611
    %v1975 = vunpack.c.h.b16 %v1611
    %v1976 = vunpack.c.l.b16 %v1612
    %v1977 = vunpack.c.h.b16 %v1612
    %v1978 = vunpack.c.l.b16 %v1613
    %v1979 = vunpack.c.h.b16 %v1613
    %v1980 = vunpack.c.l.b16 %v1614
    %v1981 = vunpack.c.h.b16 %v1614
    %v1982 = vunpack.c.l.b16 %v1615
    %v1983 = vunpack.c.h.b16 %v1615
    %v1984 = vunpack.c.l.b16 %v1616
    %v1985 = vunpack.c.h.b16 %v1616
    %v1986 = vunpack.c.l.b16 %v1617
    %v1987 = vunpack.c.h.b16 %v1617
    %v1988 = vunpack.c.l.b16 %v1618
    %v1989 = vunpack.c.h.b16 %v1618
    %v1990 = vunpack.c.l.b16 %v1619
    %v1991 = vunpack.c.h.b16 %v1619
    %v1992 = vunpack.c.l.b16 %v1620
    %v1993 = vunpack.c.h.b16 %v1620
    %v1994 = vunpack.c.l.b16 %v1621
    %v1995 = vunpack.c.h.b16 %v1621
    %v1996 = vunpack.c.l.b16 %v1622
    %v1997 = vunpack.c.h.b16 %v1622
    %v1998 = vunpack.c.l.b16 %v1623
    %v1999 = vunpack.c.h.b16 %v1623
    %v2000 = vunpack.c.l.b16 %v1624
    %v2001 = vunpack.c.h.b16 %v1624
    %v2002 = vunpack.c.l.b16 %v1625
    %v2003 = vunpack.c.h.b16 %v1625
    %v2004 = vunpack.c.l.b16 %v1626
    %v2005 = vunpack.c.h.b16 %v1626
    %v2006 = vunpack.c.l.b16 %v1627
    %v2007 = vunpack.c.h.b16 %v1627
    %v2008 = vunpack.c.l.b16 %v1628
    %v2009 = vunpack.c.h.b16 %v1628
    %v2010 = vunpack.c.l.b16 %v1629
    %v2011 = vunpack.c.h.b16 %v1629
    %v2012 = vunpack.c.l.b16 %v1630
    %v2013 = vunpack.c.h.b16 %v1630
    %v2014 = vunpack.c.l.b16 %v1631
    %v2015 = vunpack.c.h.b16 %v1631
    %v2016 = vunpack.c.l.b16 %v1632
    %v2017 = vunpack.c.h.b16 %v1632
    %v2018 = vunpack.c.l.b16 %v1633
    %v2019 = vunpack.c.h.b16 %v1633
    %v2020 = vunpack.c.l.b16 %v1634
    %v2021 = vunpack.c.h.b16 %v1634
    %v2022 = vunpack.c.l.b16 %v1635
    %v2023 = vunpack.c.h.b16 %v1635
    %v2024 = vunpack.c.l.b16 %v1636
    %v2025 = vunpack.c.h.b16 %v1636
    %v2026 = vunpack.c.l.b16 %v1637
    %v2027 = vunpack.c.h.b16 %v1637
    %v2028 = vunpack.c.l.b16 %v1638
    %v2029 = vunpack.c.h.b16 %v1638
    %v2030 = vunpack.c.l.b16 %v1639
    %v2031 = vunpack.c.h.b16 %v1639
    %v2032 = vunpack.c.l.b16 %v1640
    %v2033 = vunpack.c.h.b16 %v1640
    %v2034 = vunpack.c.l.b16 %v1641
    %v2035 = vunpack.c.h.b16 %v1641
    %v2036 = vunpack.c.l.b16 %v1642
    %v2037 = vunpack.c.h.b16 %v1642
    %v2038 = vunpack.c.l.b16 %v1643
    %v2039 = vunpack.c.h.b16 %v1643
    %v2040 = vunpack.c.l.b16 %v1644
    %v2041 = vunpack.c.h.b16 %v1644
    %v2042 = vunpack.c.l.b16 %v1645
    %v2043 = vunpack.c.h.b16 %v1645
    %v2044 = vunpack.c.l.b16 %v1646
    %v2045 = vunpack.c.h.b16 %v1646
    %v2046 = vunpack.c.l.b16 %v1647
    %v2047 = vunpack.c.h.b16 %v1647
    %v2048 = vunpack.c.l.b16 %v1648
    %v2049 = vunpack.c.h.b16 %v1648
    %v2050 = vunpack.c.l.b16 %v1649
    %v2051 = vunpack.c.h.b16 %v1649
    %v2052 = vunpack.c.l.b16 %v1650
    %v2053 = vunpack.c.h.b16 %v1650
    %v2054 = vunpack.c.l.b16 %v1651
    %v2055 = vunpack.c.h.b16 %v1651
    %v2056 = vunpack.c.l.b16 %v1652
    %v2057 = vunpack.c.h.b16 %v1652
    %v2058 = vunpack.c.l.b16 %v1653
    %v2059 = vunpack.c.h.b16 %v1653
    %v2060 = vpack.c.b16 %v1808, %v1804
    %v2061 = vpack.c.b16 %v1809, %v1805
    %v2062 = vpack.c.b16 %v1810, %v1806
    %v2063 = vpack.c.b16 %v1811, %v1807
    %v2064 = vpack.c.b16 %v1816, %v1812
    %v2065 = vpack.c.b16 %v1817, %v1813
    %v2066 = vpack.c.b16 %v1818, %v1814
    %v2067 = vpack.c.b16 %v1819, %v1815
    %v2068 = vpack.c.b16 %v1824, %v1820
    %v2069 = vpack.c.b16 %v1825, %v1821
    %v2070 = vpack.c.b16 %v1826, %v1822
    %v2071 = vpack.c.b16 %v1827, %v1823
    %v2072 = vpack.c.b16 %v1832, %v1828
    %v2073 = vpack.c.b16 %v1833, %v1829
    %v2074 = vpack.c.b16 %v1834, %v1830
    %v2075 = vpack.c.b16 %v1835, %v1831
    %v2076 = vpack.c.b16 %v1840, %v1836
    %v2077 = vpack.c.b16 %v1841, %v1837
    %v2078 = vpack.c.b16 %v1842, %v1838
    %v2079 = vpack.c.b16 %v1843, %v1839
    %v2080 = vpack.c.b16 %v1848, %v1844
    %v2081 = vpack.c.b16 %v1849, %v1845
    %v2082 = vpack.c.b16 %v1850, %v1846
    %v2083 = vpack.c.b16 %v1851, %v1847
    %v2084 = vpack.c.b16 %v1856, %v1852
    %v2085 = vpack.c.b16 %v1857, %v1853
    %v2086 = vpack.c.b16 %v1858, %v1854
    %v2087 = vpack.c.b16 %v1859, %v1855
    %v2088 = vpack.c.b16 %v1864, %v1860
    %v2089 = vpack.c.b16 %v1865, %v1861
    %v2090 = vpack.c.b16 %v1866, %v1862
    %v2091 = vpack.c.b16 %v1867, %v1863
    %v2092 = vpack.c.b16 %v1872, %v1868
    %v2093 = vpack.c.b16 %v1873, %v1869
    %v2094 = vpack.c.b16 %v1874, %v1870
    %v2095 = vpack.c.b16 %v1875, %v1871
    %v2096 = vpack.c.b16 %v1880, %v1876
    %v2097 = vpack.c.b16 %v1881, %v1877
    %v2098 = vpack.c.b16 %v1882, %v1878
    %v2099 = vpack.c.b16 %v1883, %v1879
    %v2100 = vpack.c.b16 %v1888, %v1884
    %v2101 = vpack.c.b16 %v1889, %v1885
    %v2102 = vpack.c.b16 %v1890, %v1886
    %v2103 = vpack.c.b16 %v1891, %v1887
    %v2104 = vpack.c.b16 %v1896, %v1892
    %v2105 = vpack.c.b16 %v1897, %v1893
    %v2106 = vpack.c.b16 %v1898, %v1894
    %v2107 = vpack.c.b16 %v1899, %v1895
    %v2108 = vpack.c.b16 %v1904, %v1900
    %v2109 = vpack.c.b16 %v1905, %v1901
    %v2110 = vpack.c.b16 %v1906, %v1902
    %v2111 = vpack.c.b16 %v1907, %v1903
    %v2112 = vpack.c.b16 %v1912, %v1908
    %v2113 = vpack.c.b16 %v1913, %v1909
    %v2114 = vpack.c.b16 %v1914, %v1910
    %v2115 = vpack.c.b16 %v1915, %v1911
    %v2116 = vpack.c.b16 %v1920, %v1916
    %v2117 = vpack.c.b16 %v1921, %v1917
    %v2118 = vpack.c.b16 %v1922, %v1918
    %v2119 = vpack.c.b16 %v1923, %v1919
    %v2120 = vpack.c.b16 %v1928, %v1924
    %v2121 = vpack.c.b16 %v1929, %v1925
    %v2122 = vpack.c.b16 %v1930, %v1926
    %v2123 = vpack.c.b16 %v1931, %v1927
    %v2124 = vpack.c.b16 %v1936, %v1932
    %v2125 = vpack.c.b16 %v1937, %v1933
    %v2126 = vpack.c.b16 %v1938, %v1934
    %v2127 = vpack.c.b16 %v1939, %v1935
    %v2128 = vpack.c.b16 %v1944, %v1940
    %v2129 = vpack.c.b16 %v1945, %v1941
    %v2130 = vpack.c.b16 %v1946, %v1942
    %v2131 = vpack.c.b16 %v1947, %v1943
    %v2132 = vpack.c.b16 %v1952, %v1948
    %v2133 = vpack.c.b16 %v1953, %v1949
    %v2134 = vpack.c.b16 %v1954, %v1950
    %v2135 = vpack.c.b16 %v1955, %v1951
    %v2136 = vpack.c.b16 %v1960, %v1956
    %v2137 = vpack.c.b16 %v1961, %v1957
    %v2138 = vpack.c.b16 %v1962, %v1958
    %v2139 = vpack.c.b16 %v1963, %v1959
    %v2140 = vpack.c.b16 %v1968, %v1964
    %v2141 = vpack.c.b16 %v1969, %v1965
    %v2142 = vpack.c.b16 %v1970, %v1966
    %v2143 = vpack.c.b16 %v1971, %v1967
    %v2144 = vpack.c.b16 %v1976, %v1972
    %v2145 = vpack.c.b16 %v1977, %v1973
    %v2146 = vpack.c.b16 %v1978, %v1974
    %v2147 = vpack.c.b16 %v1979, %v1975
    %v2148 = vpack.c.b16 %v1984, %v1980
    %v2149 = vpack.c.b16 %v1985, %v1981
    %v2150 = vpack.c.b16 %v1986, %v1982
    %v2151 = vpack.c.b16 %v1987, %v1983
    %v2152 = vpack.c.b16 %v1992, %v1988
    %v2153 = vpack.c.b16 %v1993, %v1989
    %v2154 = vpack.c.b16 %v1994, %v1990
    %v2155 = vpack.c.b16 %v1995, %v1991
    %v2156 = vpack.c.b16 %v2000, %v1996
    %v2157 = vpack.c.b16 %v2001, %v1997
    %v2158 = vpack.c.b16 %v2002, %v1998
    %v2159 = vpack.c.b16 %v2003, %v1999
    %v2160 = vpack.c.b16 %v2008, %v2004
    %v2161 = vpack.c.b16 %v2009, %v2005
    %v2162 = vpack.c.b16 %v2010, %v2006
    %v2163 = vpack.c.b16 %v2011, %v2007
    %v2164 = vpack.c.b16 %v2016, %v2012
    %v2165 = vpack.c.b16 %v2017, %v2013
    %v2166 = vpack.c.b16 %v2018, %v2014
    %v2167 = vpack.c.b16 %v2019, %v2015
    %v2168 = vpack.c.b16 %v2024, %v2020
    %v2169 = vpack.c.b16 %v2025, %v2021
    %v2170 = vpack.c.b16 %v2026, %v2022
    %v2171 = vpack.c.b16 %v2027, %v2023
    %v2172 = vpack.c.b16 %v2032, %v2028
    %v2173 = vpack.c.b16 %v2033, %v2029
    %v2174 = vpack.c.b16 %v2034, %v2030
    %v2175 = vpack.c.b16 %v2035, %v2031
    %v2176 = vpack.c.b16 %v2040, %v2036
    %v2177 = vpack.c.b16 %v2041, %v2037
    %v2178 = vpack.c.b16 %v2042, %v2038
    %v2179 = vpack.c.b16 %v2043, %v2039
    %v2180 = vpack.c.b16 %v2048, %v2044
    %v2181 = vpack.c.b16 %v2049, %v2045
    %v2182 = vpack.c.b16 %v2050, %v2046
    %v2183 = vpack.c.b16 %v2051, %v2047
    %v2184 = vpack.c.b16 %v2056, %v2052
    %v2185 = vpack.c.b16 %v2057, %v2053
    %v2186 = vpack.c.b16 %v2058, %v2054
    %v2187 = vpack.c.b16 %v2059, %v2055
    %2316 = vmatprep.subr.bf16.mxu0 %v2089
    %2317 = vmatpush1.bf16.msra.mxu0 %v2088
    %2318 = vmatprep.subr.bf16.mxu0 %v2085
    %2319 = vmatpush1.bf16.msra.mxu0 %v2084
    %2320 = vmatprep.subr.bf16.mxu0 %v2081
    %2321 = vmatpush1.bf16.msra.mxu0 %v2080
    %2322 = vmatprep.subr.bf16.mxu0 %v2077
    %2323 = vmatpush1.bf16.msra.mxu0 %v2076
    %2324 = vmatprep.subr.bf16.mxu0 %v2073
    %2325 = vmatpush1.bf16.msra.mxu0 %v2072
    %2326 = vmatprep.subr.bf16.mxu0 %v2069
    %2327 = vmatpush1.bf16.msra.mxu0 %v2068
    %2328 = vmatprep.subr.bf16.mxu0 %v2065
    %2329 = vmatpush1.bf16.msra.mxu0 %v2064
    %2330 = vmatprep.subr.bf16.mxu0 %v2061
    %2331 = vmatpush1.bf16.msra.mxu0 %v2060
    %2332 = vmatprep.subr.bf16.mxu0 %v2121
    %2333 = vmatpush2.bf16.msra.mxu0 %v2120
    %2334 = vmatprep.subr.bf16.mxu0 %v2117
    %2335 = vmatpush2.bf16.msra.mxu0 %v2116
    %2336 = vmatprep.subr.bf16.mxu0 %v2113
    %2337 = vmatpush2.bf16.msra.mxu0 %v2112
    %2338 = vmatprep.subr.bf16.mxu0 %v2109
    %2339 = vmatpush2.bf16.msra.mxu0 %v2108
    %2340 = vmatprep.subr.bf16.mxu0 %v2105
    %2341 = vmatpush2.bf16.msra.mxu0 %v2104
    %2342 = vmatprep.subr.bf16.mxu0 %v2101
    %2343 = vmatpush2.bf16.msra.mxu0 %v2100
    %2344 = vmatprep.subr.bf16.mxu0 %v2097
    %2345 = vmatpush2.bf16.msra.mxu0 %v2096
    %2346 = vmatprep.subr.bf16.mxu0 %v2093
    %2347 = vmatpush2.bf16.msra.mxu0 %v2092
    %2348 = vmatprep.mubr.bf16.mxu0 %v1523
    %2349 = vmatmul.mubr.bf16.gmra.mxu0 %v1522
    %v2350 = vpop.f32.mrf.mxu0
    %v2351 = vadd.f32 %v1659, %v2350
    %v2352 = vpop.f32.mrf.mxu0
    %v2353 = vadd.f32 %v1663, %v2352
    %v2354 = vpop.f32.mrf.mxu0
    %v2355 = vpop.f32.mrf.mxu0
    %2356 = vdwg.mxu0
    %2357 = vmatprep.subr.bf16.mxu0 %v2153
    %2358 = vmatpush1.bf16.msra.mxu0 %v2152
    %2359 = vmatprep.subr.bf16.mxu0 %v2149
    %2360 = vmatpush1.bf16.msra.mxu0 %v2148
    %2361 = vmatprep.subr.bf16.mxu0 %v2145
    %2362 = vmatpush1.bf16.msra.mxu0 %v2144
    %2363 = vmatprep.subr.bf16.mxu0 %v2141
    %2364 = vmatpush1.bf16.msra.mxu0 %v2140
    %2365 = vmatprep.subr.bf16.mxu0 %v2137
    %2366 = vmatpush1.bf16.msra.mxu0 %v2136
    %2367 = vmatprep.subr.bf16.mxu0 %v2133
    %2368 = vmatpush1.bf16.msra.mxu0 %v2132
    %2369 = vmatprep.subr.bf16.mxu0 %v2129
    %2370 = vmatpush1.bf16.msra.mxu0 %v2128
    %2371 = vmatprep.subr.bf16.mxu0 %v2125
    %2372 = vmatpush1.bf16.msra.mxu0 %v2124
    %2373 = vmatprep.subr.bf16.mxu0 %v2185
    %2374 = vmatpush2.bf16.msra.mxu0 %v2184
    %2375 = vmatprep.subr.bf16.mxu0 %v2181
    %2376 = vmatpush2.bf16.msra.mxu0 %v2180
    %2377 = vmatprep.subr.bf16.mxu0 %v2177
    %2378 = vmatpush2.bf16.msra.mxu0 %v2176
    %2379 = vmatprep.subr.bf16.mxu0 %v2173
    %2380 = vmatpush2.bf16.msra.mxu0 %v2172
    %2381 = vmatprep.subr.bf16.mxu0 %v2169
    %2382 = vmatpush2.bf16.msra.mxu0 %v2168
    %2383 = vmatprep.subr.bf16.mxu0 %v2165
    %2384 = vmatpush2.bf16.msra.mxu0 %v2164
    %2385 = vmatprep.subr.bf16.mxu0 %v2161
    %2386 = vmatpush2.bf16.msra.mxu0 %v2160
    %2387 = vmatprep.subr.bf16.mxu0 %v2157
    %2388 = vmatpush2.bf16.msra.mxu0 %v2156
    %2389 = vmatprep.mubr.bf16.mxu0 %v1525
    %2390 = vmatmul.mubr.bf16.gmra.mxu0 %v1524
    %v2391 = vpop.f32.mrf.mxu0
    %v2392 = vadd.f32 %v2351, %v2391
    %v2393 = vpop.f32.mrf.mxu0
    %v2394 = vadd.f32 %v2353, %v2393
    %v2395 = vpop.f32.mrf.mxu0
    %v2396 = vpop.f32.mrf.mxu0
    %2397 = vdwg.mxu0
    %2398 = vmatprep.subr.bf16.mxu0 %v2091
    %2399 = vmatpush1.bf16.msra.mxu0 %v2090
    %2400 = vmatprep.subr.bf16.mxu0 %v2087
    %2401 = vmatpush1.bf16.msra.mxu0 %v2086
    %2402 = vmatprep.subr.bf16.mxu0 %v2083
    %2403 = vmatpush1.bf16.msra.mxu0 %v2082
    %2404 = vmatprep.subr.bf16.mxu0 %v2079
    %2405 = vmatpush1.bf16.msra.mxu0 %v2078
    %2406 = vmatprep.subr.bf16.mxu0 %v2075
    %2407 = vmatpush1.bf16.msra.mxu0 %v2074
    %2408 = vmatprep.subr.bf16.mxu0 %v2071
    %2409 = vmatpush1.bf16.msra.mxu0 %v2070
    %2410 = vmatprep.subr.bf16.mxu0 %v2067
    %2411 = vmatpush1.bf16.msra.mxu0 %v2066
    %2412 = vmatprep.subr.bf16.mxu0 %v2063
    %2413 = vmatpush1.bf16.msra.mxu0 %v2062
    %2414 = vmatprep.subr.bf16.mxu0 %v2123
    %2415 = vmatpush2.bf16.msra.mxu0 %v2122
    %2416 = vmatprep.subr.bf16.mxu0 %v2119
    %2417 = vmatpush2.bf16.msra.mxu0 %v2118
    %2418 = vmatprep.subr.bf16.mxu0 %v2115
    %2419 = vmatpush2.bf16.msra.mxu0 %v2114
    %2420 = vmatprep.subr.bf16.mxu0 %v2111
    %2421 = vmatpush2.bf16.msra.mxu0 %v2110
    %2422 = vmatprep.subr.bf16.mxu0 %v2107
    %2423 = vmatpush2.bf16.msra.mxu0 %v2106
    %2424 = vmatprep.subr.bf16.mxu0 %v2103
    %2425 = vmatpush2.bf16.msra.mxu0 %v2102
    %2426 = vmatprep.subr.bf16.mxu0 %v2099
    %2427 = vmatpush2.bf16.msra.mxu0 %v2098
    %2428 = vmatprep.subr.bf16.mxu0 %v2095
    %2429 = vmatpush2.bf16.msra.mxu0 %v2094
    %2430 = vmatprep.mubr.bf16.mxu0 %v1523
    %2431 = vmatmul.mubr.bf16.gmra.mxu0 %v1522
    %v2432 = vpop.f32.mrf.mxu0
    %v2433 = vadd.f32 %v1667, %v2432
    %v2434 = vpop.f32.mrf.mxu0
    %v2435 = vadd.f32 %v1671, %v2434
    %v2436 = vpop.f32.mrf.mxu0
    %v2437 = vpop.f32.mrf.mxu0
    %2438 = vdwg.mxu0
    %2439 = vmatprep.subr.bf16.mxu0 %v2155
    %2440 = vmatpush1.bf16.msra.mxu0 %v2154
    %2441 = vmatprep.subr.bf16.mxu0 %v2151
    %2442 = vmatpush1.bf16.msra.mxu0 %v2150
    %2443 = vmatprep.subr.bf16.mxu0 %v2147
    %2444 = vmatpush1.bf16.msra.mxu0 %v2146
    %2445 = vmatprep.subr.bf16.mxu0 %v2143
    %2446 = vmatpush1.bf16.msra.mxu0 %v2142
    %2447 = vmatprep.subr.bf16.mxu0 %v2139
    %2448 = vmatpush1.bf16.msra.mxu0 %v2138
    %2449 = vmatprep.subr.bf16.mxu0 %v2135
    %2450 = vmatpush1.bf16.msra.mxu0 %v2134
    %2451 = vmatprep.subr.bf16.mxu0 %v2131
    %2452 = vmatpush1.bf16.msra.mxu0 %v2130
    %2453 = vmatprep.subr.bf16.mxu0 %v2127
    %2454 = vmatpush1.bf16.msra.mxu0 %v2126
    %2455 = vmatprep.subr.bf16.mxu0 %v2187
    %2456 = vmatpush2.bf16.msra.mxu0 %v2186
    %2457 = vmatprep.subr.bf16.mxu0 %v2183
    %2458 = vmatpush2.bf16.msra.mxu0 %v2182
    %2459 = vmatprep.subr.bf16.mxu0 %v2179
    %2460 = vmatpush2.bf16.msra.mxu0 %v2178
    %2461 = vmatprep.subr.bf16.mxu0 %v2175
    %2462 = vmatpush2.bf16.msra.mxu0 %v2174
    %2463 = vmatprep.subr.bf16.mxu0 %v2171
    %2464 = vmatpush2.bf16.msra.mxu0 %v2170
    %2465 = vmatprep.subr.bf16.mxu0 %v2167
    %2466 = vmatpush2.bf16.msra.mxu0 %v2166
    %2467 = vmatprep.subr.bf16.mxu0 %v2163
    %2468 = vmatpush2.bf16.msra.mxu0 %v2162
    %2469 = vmatprep.subr.bf16.mxu0 %v2159
    %2470 = vmatpush2.bf16.msra.mxu0 %v2158
    %2471 = vmatprep.mubr.bf16.mxu0 %v1525
    %2472 = vmatmul.mubr.bf16.gmra.mxu0 %v1524
    %v2473 = vpop.f32.mrf.mxu0
    %v2474 = vadd.f32 %v2433, %v2473
    %v2475 = vpop.f32.mrf.mxu0
    %v2476 = vadd.f32 %v2435, %v2475
    %v2477 = vpop.f32.mrf.mxu0
    %v2478 = vpop.f32.mrf.mxu0
    %2479 = vdwg.mxu0
    %v2480 = vmul.f32 %v2392, 0.2
    %v2481 = vmul.f32 %v2394, 0.2
    %v2482 = vmul.f32 %v2474, 0.2
    %v2483 = vmul.f32 %v2476, 0.2
    %v2484 = vmax.f32 %v2392, %v2480
    %v2485 = vmax.f32 %v2394, %v2481
    %v2486 = vmax.f32 %v2474, %v2482
    %v2487 = vmax.f32 %v2476, %v2483
    %v2488 = vpack.c.bf16 %v2484, %v2484
    %v2489 = vpack.c.bf16 %v2485, %v2485
    %v2490 = vpack.c.bf16 %v2486, %v2486
    %v2491 = vpack.c.bf16 %v2487, %v2487
    %v2492 = vld [vmem:[%s7] sm:$0xf]
    %v2493 = vld [vmem:[%s7 + $0x4] sm:$0xf]
    %v2494 = vld [vmem:[%s7 + $0x8] sm:$0xf]
    %v2495 = vld [vmem:[%s7 + $0xc] sm:$0xf]
    %v2496 = vld [vmem:[%s7 + $0x10] sm:$0xf]
    %v2497 = vld [vmem:[%s7 + $0x14] sm:$0xf]
    %v2498 = vld [vmem:[%s7 + $0x18] sm:$0xf]
    %v2499 = vld [vmem:[%s7 + $0x1c] sm:$0xf]
    %v2500 = vld [vmem:[%s7 + $0x20] sm:$0xf]
    %v2501 = vld [vmem:[%s7 + $0x24] sm:$0xf]
    %v2502 = vld [vmem:[%s7 + $0x28] sm:$0xf]
    %v2503 = vld [vmem:[%s7 + $0x2c] sm:$0xf]
    %v2504 = vld [vmem:[%s7 + $0x30] sm:$0xf]
    %v2505 = vld [vmem:[%s7 + $0x34] sm:$0xf]
    %v2506 = vld [vmem:[%s7 + $0x38] sm:$0xf]
    %v2507 = vld [vmem:[%s7 + $0x3c] sm:$0xf]
    %v2508 = vld [vmem:[%s7 + $0x40] sm:$0xf]
    %v2509 = vld [vmem:[%s7 + $0x44] sm:$0xf]
    %v2510 = vld [vmem:[%s7 + $0x48] sm:$0xf]
    %v2511 = vld [vmem:[%s7 + $0x4c] sm:$0xf]
    %v2512 = vld [vmem:[%s7 + $0x50] sm:$0xf]
    %v2513 = vld [vmem:[%s7 + $0x54] sm:$0xf]
    %v2514 = vld [vmem:[%s7 + $0x58] sm:$0xf]
    %v2515 = vld [vmem:[%s7 + $0x5c] sm:$0xf]
    %v2516 = vld [vmem:[%s7 + $0x60] sm:$0xf]
    %v2517 = vld [vmem:[%s7 + $0x64] sm:$0xf]
    %v2518 = vld [vmem:[%s7 + $0x68] sm:$0xf]
    %v2519 = vld [vmem:[%s7 + $0x6c] sm:$0xf]
    %v2520 = vld [vmem:[%s7 + $0x70] sm:$0xf]
    %v2521 = vld [vmem:[%s7 + $0x74] sm:$0xf]
    %v2522 = vld [vmem:[%s7 + $0x78] sm:$0xf]
    %v2523 = vld [vmem:[%s7 + $0x7c] sm:$0xf]
    %v2524 = vld [vmem:[%s7 + $0x80] sm:$0xf]
    %v2525 = vld [vmem:[%s7 + $0x84] sm:$0xf]
    %v2526 = vld [vmem:[%s7 + $0x88] sm:$0xf]
    %v2527 = vld [vmem:[%s7 + $0x8c] sm:$0xf]
    %v2528 = vld [vmem:[%s7 + $0x90] sm:$0xf]
    %v2529 = vld [vmem:[%s7 + $0x94] sm:$0xf]
    %v2530 = vld [vmem:[%s7 + $0x98] sm:$0xf]
    %v2531 = vld [vmem:[%s7 + $0x9c] sm:$0xf]
    %v2532 = vld [vmem:[%s7 + $0xa0] sm:$0xf]
    %v2533 = vld [vmem:[%s7 + $0xa4] sm:$0xf]
    %v2534 = vld [vmem:[%s7 + $0xa8] sm:$0xf]
    %v2535 = vld [vmem:[%s7 + $0xac] sm:$0xf]
    %v2536 = vld [vmem:[%s7 + $0xb0] sm:$0xf]
    %v2537 = vld [vmem:[%s7 + $0xb4] sm:$0xf]
    %v2538 = vld [vmem:[%s7 + $0xb8] sm:$0xf]
    %v2539 = vld [vmem:[%s7 + $0xbc] sm:$0xf]
    %v2540 = vld [vmem:[%s7 + $0xc0] sm:$0xf]
    %v2541 = vld [vmem:[%s7 + $0xc4] sm:$0xf]
    %v2542 = vld [vmem:[%s7 + $0xc8] sm:$0xf]
    %v2543 = vld [vmem:[%s7 + $0xcc] sm:$0xf]
    %v2544 = vld [vmem:[%s7 + $0xd0] sm:$0xf]
    %v2545 = vld [vmem:[%s7 + $0xd4] sm:$0xf]
    %v2546 = vld [vmem:[%s7 + $0xd8] sm:$0xf]
    %v2547 = vld [vmem:[%s7 + $0xdc] sm:$0xf]
    %v2548 = vld [vmem:[%s7 + $0xe0] sm:$0xf]
    %v2549 = vld [vmem:[%s7 + $0xe4] sm:$0xf]
    %v2550 = vld [vmem:[%s7 + $0xe8] sm:$0xf]
    %v2551 = vld [vmem:[%s7 + $0xec] sm:$0xf]
    %v2552 = vld [vmem:[%s7 + $0xf0] sm:$0xf]
    %v2553 = vld [vmem:[%s7 + $0xf4] sm:$0xf]
    %v2554 = vld [vmem:[%s7 + $0xf8] sm:$0xf]
    %v2555 = vld [vmem:[%s7 + $0xfc] sm:$0xf]
    %v2556 = vld [vmem:[%s8] sm:$0x1]
    %v2558 = vlaneseq
    %v2559 = vshrl.u32 %v2558, 7
    %v2560 = vsub.s32 0, %v2559
    %v2561 = vrot.slane %v2556, %v2560
    %v2627 = vunpack.c.l.b16 %v2492
    %v2628 = vunpack.c.l.b16 %v2493
    %v2629 = vunpack.c.l.b16 %v2494
    %v2630 = vunpack.c.l.b16 %v2495
    %v2631 = vunpack.c.l.b16 %v2496
    %v2632 = vunpack.c.l.b16 %v2497
    %v2633 = vunpack.c.l.b16 %v2498
    %v2634 = vunpack.c.l.b16 %v2499
    %v2635 = vunpack.c.l.b16 %v2500
    %v2636 = vunpack.c.l.b16 %v2501
    %v2637 = vunpack.c.l.b16 %v2502
    %v2638 = vunpack.c.l.b16 %v2503
    %v2639 = vunpack.c.l.b16 %v2504
    %v2640 = vunpack.c.l.b16 %v2505
    %v2641 = vunpack.c.l.b16 %v2506
    %v2642 = vunpack.c.l.b16 %v2507
    %v2643 = vunpack.c.l.b16 %v2508
    %v2644 = vunpack.c.l.b16 %v2509
    %v2645 = vunpack.c.l.b16 %v2510
    %v2646 = vunpack.c.l.b16 %v2511
    %v2647 = vunpack.c.l.b16 %v2512
    %v2648 = vunpack.c.l.b16 %v2513
    %v2649 = vunpack.c.l.b16 %v2514
    %v2650 = vunpack.c.l.b16 %v2515
    %v2651 = vunpack.c.l.b16 %v2516
    %v2652 = vunpack.c.l.b16 %v2517
    %v2653 = vunpack.c.l.b16 %v2518
    %v2654 = vunpack.c.l.b16 %v2519
    %v2655 = vunpack.c.l.b16 %v2520
    %v2656 = vunpack.c.l.b16 %v2521
    %v2657 = vunpack.c.l.b16 %v2522
    %v2658 = vunpack.c.l.b16 %v2523
    %v2659 = vunpack.c.l.b16 %v2524
    %v2660 = vunpack.c.l.b16 %v2525
    %v2661 = vunpack.c.l.b16 %v2526
    %v2662 = vunpack.c.l.b16 %v2527
    %v2663 = vunpack.c.l.b16 %v2528
    %v2664 = vunpack.c.l.b16 %v2529
    %v2665 = vunpack.c.l.b16 %v2530
    %v2666 = vunpack.c.l.b16 %v2531
    %v2667 = vunpack.c.l.b16 %v2532
    %v2668 = vunpack.c.l.b16 %v2533
    %v2669 = vunpack.c.l.b16 %v2534
    %v2670 = vunpack.c.l.b16 %v2535
    %v2671 = vunpack.c.l.b16 %v2536
    %v2672 = vunpack.c.l.b16 %v2537
    %v2673 = vunpack.c.l.b16 %v2538
    %v2674 = vunpack.c.l.b16 %v2539
    %v2675 = vunpack.c.l.b16 %v2540
    %v2676 = vunpack.c.l.b16 %v2541
    %v2677 = vunpack.c.l.b16 %v2542
    %v2678 = vunpack.c.l.b16 %v2543
    %v2679 = vunpack.c.l.b16 %v2544
    %v2680 = vunpack.c.l.b16 %v2545
    %v2681 = vunpack.c.l.b16 %v2546
    %v2682 = vunpack.c.l.b16 %v2547
    %v2683 = vunpack.c.l.b16 %v2548
    %v2684 = vunpack.c.l.b16 %v2549
    %v2685 = vunpack.c.l.b16 %v2550
    %v2686 = vunpack.c.l.b16 %v2551
    %v2687 = vunpack.c.l.b16 %v2552
    %v2688 = vunpack.c.l.b16 %v2553
    %v2689 = vunpack.c.l.b16 %v2554
    %v2690 = vunpack.c.l.b16 %v2555
    %v2691 = vpack.c.b16 %v2628, %v2627
    %v2692 = vpack.c.b16 %v2630, %v2629
    %v2693 = vpack.c.b16 %v2632, %v2631
    %v2694 = vpack.c.b16 %v2634, %v2633
    %v2695 = vpack.c.b16 %v2636, %v2635
    %v2696 = vpack.c.b16 %v2638, %v2637
    %v2697 = vpack.c.b16 %v2640, %v2639
    %v2698 = vpack.c.b16 %v2642, %v2641
    %v2699 = vpack.c.b16 %v2644, %v2643
    %v2700 = vpack.c.b16 %v2646, %v2645
    %v2701 = vpack.c.b16 %v2648, %v2647
    %v2702 = vpack.c.b16 %v2650, %v2649
    %v2703 = vpack.c.b16 %v2652, %v2651
    %v2704 = vpack.c.b16 %v2654, %v2653
    %v2705 = vpack.c.b16 %v2656, %v2655
    %v2706 = vpack.c.b16 %v2658, %v2657
    %v2707 = vpack.c.b16 %v2660, %v2659
    %v2708 = vpack.c.b16 %v2662, %v2661
    %v2709 = vpack.c.b16 %v2664, %v2663
    %v2710 = vpack.c.b16 %v2666, %v2665
    %v2711 = vpack.c.b16 %v2668, %v2667
    %v2712 = vpack.c.b16 %v2670, %v2669
    %v2713 = vpack.c.b16 %v2672, %v2671
    %v2714 = vpack.c.b16 %v2674, %v2673
    %v2715 = vpack.c.b16 %v2676, %v2675
    %v2716 = vpack.c.b16 %v2678, %v2677
    %v2717 = vpack.c.b16 %v2680, %v2679
    %v2718 = vpack.c.b16 %v2682, %v2681
    %v2719 = vpack.c.b16 %v2684, %v2683
    %v2720 = vpack.c.b16 %v2686, %v2685
    %v2721 = vpack.c.b16 %v2688, %v2687
    %v2722 = vpack.c.b16 %v2690, %v2689
    %2755 = vmatprep.subr.bf16.mxu0 0
    %2756 = vmatpush1.bf16.msra.mxu0 %v2698
    %2757 = vmatprep.subr.bf16.mxu0 0
    %2758 = vmatpush1.bf16.msra.mxu0 %v2697
    %2759 = vmatprep.subr.bf16.mxu0 0
    %2760 = vmatpush1.bf16.msra.mxu0 %v2696
    %2761 = vmatprep.subr.bf16.mxu0 0
    %2762 = vmatpush1.bf16.msra.mxu0 %v2695
    %2763 = vmatprep.subr.bf16.mxu0 0
    %2764 = vmatpush1.bf16.msra.mxu0 %v2694
    %2765 = vmatprep.subr.bf16.mxu0 0
    %2766 = vmatpush1.bf16.msra.mxu0 %v2693
    %2767 = vmatprep.subr.bf16.mxu0 0
    %2768 = vmatpush1.bf16.msra.mxu0 %v2692
    %2769 = vmatprep.subr.bf16.mxu0 0
    %2770 = vmatpush1.bf16.msra.mxu0 %v2691
    %2771 = vmatprep.subr.bf16.mxu0 0
    %2772 = vmatpush2.bf16.msra.mxu0 %v2706
    %2773 = vmatprep.subr.bf16.mxu0 0
    %2774 = vmatpush2.bf16.msra.mxu0 %v2705
    %2775 = vmatprep.subr.bf16.mxu0 0
    %2776 = vmatpush2.bf16.msra.mxu0 %v2704
    %2777 = vmatprep.subr.bf16.mxu0 0
    %2778 = vmatpush2.bf16.msra.mxu0 %v2703
    %2779 = vmatprep.subr.bf16.mxu0 0
    %2780 = vmatpush2.bf16.msra.mxu0 %v2702
    %2781 = vmatprep.subr.bf16.mxu0 0
    %2782 = vmatpush2.bf16.msra.mxu0 %v2701
    %2783 = vmatprep.subr.bf16.mxu0 0
    %2784 = vmatpush2.bf16.msra.mxu0 %v2700
    %2785 = vmatprep.subr.bf16.mxu0 0
    %2786 = vmatpush2.bf16.msra.mxu0 %v2699
    %2787 = vmatprep.mubr.bf16.mxu0 %v2489
    %2788 = vmatmul.mubr.bf16.gmra.mxu0 %v2488
    %v2789 = vpop.f32.mrf.mxu0
    %v2790 = vadd.f32 %v2561, %v2789
    %v2791 = vpop.f32.mrf.mxu0
    %v2792 = vpop.f32.mrf.mxu0
    %v2793 = vpop.f32.mrf.mxu0
    %2794 = vdwg.mxu0
    %2795 = vmatprep.subr.bf16.mxu0 0
    %2796 = vmatpush1.bf16.msra.mxu0 %v2714
    %2797 = vmatprep.subr.bf16.mxu0 0
    %2798 = vmatpush1.bf16.msra.mxu0 %v2713
    %2799 = vmatprep.subr.bf16.mxu0 0
    %2800 = vmatpush1.bf16.msra.mxu0 %v2712
    %2801 = vmatprep.subr.bf16.mxu0 0
    %2802 = vmatpush1.bf16.msra.mxu0 %v2711
    %2803 = vmatprep.subr.bf16.mxu0 0
    %2804 = vmatpush1.bf16.msra.mxu0 %v2710
    %2805 = vmatprep.subr.bf16.mxu0 0
    %2806 = vmatpush1.bf16.msra.mxu0 %v2709
    %2807 = vmatprep.subr.bf16.mxu0 0
    %2808 = vmatpush1.bf16.msra.mxu0 %v2708
    %2809 = vmatprep.subr.bf16.mxu0 0
    %2810 = vmatpush1.bf16.msra.mxu0 %v2707
    %2811 = vmatprep.subr.bf16.mxu0 0
    %2812 = vmatpush2.bf16.msra.mxu0 %v2722
    %2813 = vmatprep.subr.bf16.mxu0 0
    %2814 = vmatpush2.bf16.msra.mxu0 %v2721
    %2815 = vmatprep.subr.bf16.mxu0 0
    %2816 = vmatpush2.bf16.msra.mxu0 %v2720
    %2817 = vmatprep.subr.bf16.mxu0 0
    %2818 = vmatpush2.bf16.msra.mxu0 %v2719
    %2819 = vmatprep.subr.bf16.mxu0 0
    %2820 = vmatpush2.bf16.msra.mxu0 %v2718
    %2821 = vmatprep.subr.bf16.mxu0 0
    %2822 = vmatpush2.bf16.msra.mxu0 %v2717
    %2823 = vmatprep.subr.bf16.mxu0 0
    %2824 = vmatpush2.bf16.msra.mxu0 %v2716
    %2825 = vmatprep.subr.bf16.mxu0 0
    %2826 = vmatpush2.bf16.msra.mxu0 %v2715
    %2827 = vmatprep.mubr.bf16.mxu0 %v2491
    %2828 = vmatmul.mubr.bf16.gmra.mxu0 %v2490
    %v2829 = vpop.f32.mrf.mxu0
    %v2830 = vadd.f32 %v2790, %v2829
    %v2831 = vpop.f32.mrf.mxu0
    %v2832 = vpop.f32.mrf.mxu0
    %v2833 = vpop.f32.mrf.mxu0
    %2834 = vdwg.mxu0
    %2835 = vst [vmem:[%s9] sm:$0xff] %v2830
    // Predicated region
    $region50: #{discriminator_forward.1} parent=1 // pred_check
      _
    $region51: #{discriminator_forward.1} parent=1 // pred_check_branch
      %2837 = sbr.rel (0) target = $region53
    $region52: #{discriminator_forward.1} parent=1 // pred_region
      _
    $region53: #{discriminator_forward.1} parent=1 // pred_fallthru
      _
    // Predicated region
    $region54: #{discriminator_forward.1} parent=1 // pred_check
      _
    $region55: #{discriminator_forward.1} parent=1 // pred_check_branch
      %2839 = sbr.rel (0) target = $region57
    $region56: #{discriminator_forward.1} parent=1 // pred_region
      _
    $region57: #{discriminator_forward.1} parent=1 // pred_fallthru
      _
    %2840 = vsyncpa [#allocation3], 1
    %2841 = vsyncpa [#allocation5], 1

</llo_original>
